<compile_context>
chip_gen: v5e
topology: v5e:2x2
jax: 0.10.0
libtpu: 0.0.40
codegen_flags: <defaults>
</compile_context>

<pallas_src>
import functools
import math

import jax
import jax.numpy as jnp
from jax.experimental import pallas as pl
from jax.experimental.pallas import tpu as pltpu


_VMEM_LIMIT = 40 * 1024 * 1024   # v7x-safe scoped-VMEM limit (64 MiB physical)


# ----------------------------------------------------------------------------
# small helpers
# ----------------------------------------------------------------------------

def _pad_axis(a, axis, mult):
    size = a.shape[axis]
    pad = (-size) % mult
    if pad == 0:
        return a
    widths = [(0, 0)] * a.ndim
    widths[axis] = (0, pad)
    return jnp.pad(a, widths)


def _pick_tile(dim, pref):
    """Full-dim block when it already fits, else the preferred tile."""
    return dim if dim <= pref else pref


def _gelu_tanh(y):
    # tanh-approximate GELU (EUP-routed); small deviation from torch's exact
    # erf GELU, acceptable for inference.
    c = math.sqrt(2.0 / math.pi)
    return 0.5 * y * (1.0 + jnp.tanh(c * (y + 0.044715 * y * y * y)))


# ----------------------------------------------------------------------------
# Kernel 1: row-tiled matmul with VMEM-resident weight and fused
#           bias / GELU / residual epilogue
# ----------------------------------------------------------------------------

def _linear_kernel(x_ref, w_ref, b_ref, *rest, activation, has_residual):
    if has_residual:
        res_ref, o_ref = rest
    else:
        (o_ref,) = rest
    y = jnp.dot(x_ref[...], w_ref[...], preferred_element_type=jnp.float32)
    y = y + b_ref[...].astype(jnp.float32)
    if activation == "gelu":
        y = _gelu_tanh(y)
    if has_residual:
        y = y + res_ref[...].astype(jnp.float32)
    o_ref[...] = y.astype(o_ref.dtype)


def pallas_linear(x, w, b, residual=None, activation=None,
                  *, tm=256, out_dtype=None):
    """y = act(x @ w + b) (+ residual).  x:(M,K) w:(K,N) b:(N,).

    The full (K, N) weight is held resident in VMEM; the grid only walks row
    tiles, so the weight is streamed from HBM once per pallas_call.
    """
    M, K = x.shape
    Kw, N = w.shape
    assert K == Kw
    out_dtype = out_dtype or x.dtype

    tm_ = _pick_tile(M, tm)
    xp = _pad_axis(x, 0, tm_)
    Mp = xp.shape[0]

    in_specs = [
        pl.BlockSpec((tm_, K), lambda i: (i, 0)),
        pl.BlockSpec((K, N), lambda i: (0, 0)),      # resident weight
        pl.BlockSpec((1, N), lambda i: (0, 0)),
    ]
    args = [xp, w, b.reshape(1, N)]
    if residual is not None:
        rp = _pad_axis(residual, 0, tm_)
        in_specs.append(pl.BlockSpec((tm_, N), lambda i: (i, 0)))
        args.append(rp)

    kernel = functools.partial(_linear_kernel, activation=activation,
                               has_residual=residual is not None)
    out = pl.pallas_call(
        kernel,
        out_shape=jax.ShapeDtypeStruct((Mp, N), out_dtype),
        grid=(Mp // tm_,),
        in_specs=in_specs,
        out_specs=pl.BlockSpec((tm_, N), lambda i: (i, 0)),
        compiler_params=pltpu.CompilerParams(
            dimension_semantics=("parallel",),
            vmem_limit_bytes=_VMEM_LIMIT),
    )(*args)
    return out[:M]


# ----------------------------------------------------------------------------
# Kernel 2: fused LayerNorm prologue + resident-weight matmul (+ optional GELU)
#           (LN is computed exactly once per row tile -- no j grid axis)
# ----------------------------------------------------------------------------

def _ln_linear_kernel(x_ref, g_ref, bln_ref, w_ref, b_ref, o_ref,
                      *, eps, activation):
    x = x_ref[...].astype(jnp.float32)
    mean = jnp.mean(x, axis=-1, keepdims=True)
    xc = x - mean
    var = jnp.mean(xc * xc, axis=-1, keepdims=True)   # biased var (torch LN)
    xn = xc * jax.lax.rsqrt(var + eps)
    xn = xn * g_ref[...].astype(jnp.float32) + bln_ref[...].astype(jnp.float32)
    y = jnp.dot(xn.astype(w_ref.dtype), w_ref[...],
                preferred_element_type=jnp.float32)
    y = y + b_ref[...].astype(jnp.float32)
    if activation == "gelu":
        y = _gelu_tanh(y)
    o_ref[...] = y.astype(o_ref.dtype)


def pallas_ln_linear(x, gamma, beta, w, b, activation=None,
                     *, eps=1e-6, tm=256, out_dtype=None):
    """y = act(LayerNorm(x) @ w + b), weight resident in VMEM."""
    M, K = x.shape
    Kw, N = w.shape
    assert K == Kw
    out_dtype = out_dtype or x.dtype

    tm_ = _pick_tile(M, tm)
    xp = _pad_axis(x, 0, tm_)
    Mp = xp.shape[0]

    kernel = functools.partial(_ln_linear_kernel, eps=eps, activation=activation)
    out = pl.pallas_call(
        kernel,
        out_shape=jax.ShapeDtypeStruct((Mp, N), out_dtype),
        grid=(Mp // tm_,),
        in_specs=[
            pl.BlockSpec((tm_, K), lambda i: (i, 0)),
            pl.BlockSpec((1, K), lambda i: (0, 0)),
            pl.BlockSpec((1, K), lambda i: (0, 0)),
            pl.BlockSpec((K, N), lambda i: (0, 0)),   # resident weight
            pl.BlockSpec((1, N), lambda i: (0, 0)),
        ],
        out_specs=pl.BlockSpec((tm_, N), lambda i: (i, 0)),
        compiler_params=pltpu.CompilerParams(
            dimension_semantics=("parallel",),
            vmem_limit_bytes=_VMEM_LIMIT),
    )(xp, gamma.reshape(1, K), beta.reshape(1, K), w, b.reshape(1, N))
    return out[:M]


# ----------------------------------------------------------------------------
# Kernel 3: standalone LayerNorm (applied only to the CLS rows)
# ----------------------------------------------------------------------------

def _layernorm_kernel(x_ref, g_ref, b_ref, o_ref, *, eps):
    x = x_ref[...].astype(jnp.float32)
    mean = jnp.mean(x, axis=-1, keepdims=True)
    xc = x - mean
    var = jnp.mean(xc * xc, axis=-1, keepdims=True)
    y = xc * jax.lax.rsqrt(var + eps) * g_ref[...].astype(jnp.float32) \
        + b_ref[...].astype(jnp.float32)
    o_ref[...] = y.astype(o_ref.dtype)


def pallas_layernorm(x, gamma, beta, *, eps=1e-6, tm=256, out_dtype=None):
    M, D = x.shape
    out_dtype = out_dtype or x.dtype
    tm_ = _pick_tile(M, tm)
    xp = _pad_axis(x, 0, tm_)
    Mp = xp.shape[0]
    kernel = functools.partial(_layernorm_kernel, eps=eps)
    out = pl.pallas_call(
        kernel,
        out_shape=jax.ShapeDtypeStruct((Mp, D), out_dtype),
        grid=(Mp // tm_,),
        in_specs=[
            pl.BlockSpec((tm_, D), lambda i: (i, 0)),
            pl.BlockSpec((1, D), lambda i: (0, 0)),
            pl.BlockSpec((1, D), lambda i: (0, 0)),
        ],
        out_specs=pl.BlockSpec((tm_, D), lambda i: (i, 0)),
        compiler_params=pltpu.CompilerParams(dimension_semantics=("parallel",)),
    )(xp, gamma.reshape(1, D), beta.reshape(1, D))
    return out[:M]


# ----------------------------------------------------------------------------
# Kernel 4: multi-head attention on the packed QKV tensor
#   * grid = (B, head_groups) -> >=2 parallel tiles for v7x's two TCs
#   * bf16 MXU operands, f32 softmax statistics, no k transpose
# ----------------------------------------------------------------------------

def _attention_kernel(qkv_ref, o_ref, *, heads_per_group, dh, dim, scale,
                      n_groups):
    gw = heads_per_group * dh
    outs = []
    for hh in range(heads_per_group):            # static unrolled head loop
        if n_groups == 1:
            off = hh * dh                        # fully static slices
        else:
            off = pl.multiple_of(pl.program_id(1) * gw, gw) + hh * dh
        q = qkv_ref[0, :, pl.ds(off, dh)]                 # (S, dh) bf16
        k = qkv_ref[0, :, pl.ds(dim + off, dh)]           # (S, dh) bf16
        v = qkv_ref[0, :, pl.ds(2 * dim + off, dh)]       # (S, dh) bf16
        # score matmul: contract last dims, no explicit transpose of k
        s = jax.lax.dot_general(q, k, (((1,), (1,)), ((), ())),
                                preferred_element_type=jnp.float32) * scale
        s = s - jnp.max(s, axis=-1, keepdims=True)
        p = jnp.exp(s)
        p = p * pl.reciprocal(jnp.sum(p, axis=-1, keepdims=True), approx=True)
        outs.append(jnp.dot(p.astype(v.dtype), v,
                            preferred_element_type=jnp.float32)
                    .astype(o_ref.dtype))
    # one lane-dense (S, gw) store per group (<=2-way concat at ViT-Base)
    o_ref[0] = outs[0] if len(outs) == 1 else jnp.concatenate(outs, axis=-1)


def pallas_attention(qkv, n_heads, scale, *, out_dtype=None):
    """qkv: (B, S, 3D) packed exactly as the fused LN+QKV matmul produced it.
    Returns (B, S, D) in (token, head*dh) layout -> feeds the proj matmul."""
    # TODO(synk): at long sequence length switch the inner body to a
    # flash-style KV-tiled online-softmax loop; dense per-(batch, head-group)
    # is fine at ViT-Base S=197.
    B, S, threeD = qkv.shape
    D = threeD // 3
    dh = D // n_heads
    out_dtype = out_dtype or qkv.dtype

    # head-group width: lane-dense 128 when possible, otherwise the full D
    if D <= 128 or 128 % dh != 0:
        gw = D
    else:
        gw = 128
    heads_per_group = gw // dh
    n_groups = D // gw

    kernel = functools.partial(_attention_kernel,
                               heads_per_group=heads_per_group, dh=dh,
                               dim=D, scale=scale, n_groups=n_groups)
    return pl.pallas_call(
        kernel,
        out_shape=jax.ShapeDtypeStruct((B, S, D), out_dtype),
        grid=(B, n_groups),
        # full packed QKV block per batch element; resident across the group
        # axis (same block index), each group writes its own output columns.
        in_specs=[pl.BlockSpec((1, S, threeD), lambda b, g: (b, 0, 0))],
        out_specs=pl.BlockSpec((1, S, gw), lambda b, g: (b, 0, g)),
        compiler_params=pltpu.CompilerParams(
            dimension_semantics=("parallel", "parallel"),
            vmem_limit_bytes=_VMEM_LIMIT),
    )(qkv)


# ----------------------------------------------------------------------------
# ViT forward (cheap glue in plain JAX, hot path in the Pallas kernels above)
# ----------------------------------------------------------------------------

def extract_patches(x, patch):
    """x: (B, C, H, W) NCHW -> (B, num_patches, C*patch*patch), matching
    Conv2d(kernel=stride=patch) weight flattening order (C, ph, pw)."""
    B, C, H, W = x.shape
    nh, nw = H // patch, W // patch
    x = x.reshape(B, C, nh, patch, nw, patch)
    x = x.transpose(0, 2, 4, 1, 3, 5)            # (B, nh, nw, C, ph, pw)
    return x.reshape(B, nh * nw, C * patch * patch)


def vit_forward(x, params, cfg):
    B = x.shape[0]
    D, H = cfg["dim"], cfg["heads"]
    dh = D // H
    scale = dh ** -0.5
    cdt = jnp.bfloat16            # MXU operand dtype (f32 accumulation inside)

    def w16(a):
        return a.astype(cdt)

    # --- patch embedding (Conv2d k=16 s=16 as a resident-weight matmul) ---
    patches = extract_patches(x, cfg["patch"]).astype(cdt)       # (B, Np, C*P*P)
    Np_ = patches.shape[1]
    tok = pallas_linear(patches.reshape(B * Np_, -1),
                        w16(params["patch_w"]), params["patch_b"],
                        out_dtype=cdt)
    tok = tok.reshape(B, Np_, D)

    # --- cls token + positional embedding (cheap XLA glue) ---
    cls = jnp.broadcast_to(params["cls_token"], (B, 1, D)).astype(cdt)
    h = jnp.concatenate([cls, tok], axis=1).astype(jnp.float32)
    h = h + params["pos_embed"]                  # residual stream carried in f32
    S = h.shape[1]

    # --- transformer blocks (pre-LN), fused LN/matmul/residual kernels ---
    h2 = h.reshape(B * S, D)                     # f32 residual carry
    for blk in params["blocks"]:
        # attention sub-block: LN1+QKV fused, packed-QKV attention, proj+residual
        qkv = pallas_ln_linear(h2, blk["ln1_g"], blk["ln1_b"],
                               w16(blk["qkv_w"]), blk["qkv_b"], out_dtype=cdt)
        attn = pallas_attention(qkv.reshape(B, S, 3 * D), H, scale, out_dtype=cdt)
        h2 = pallas_linear(attn.reshape(B * S, D),
                           w16(blk["proj_w"]), blk["proj_b"],
                           residual=h2, out_dtype=jnp.float32)
        # MLP sub-block: LN2+fc1+GELU fused, fc2+residual fused
        hm = pallas_ln_linear(h2, blk["ln2_g"], blk["ln2_b"],
                              w16(blk["fc1_w"]), blk["fc1_b"],
                              activation="gelu", out_dtype=cdt)
        h2 = pallas_linear(hm, w16(blk["fc2_w"]), blk["fc2_b"],
                           residual=h2, out_dtype=jnp.float32)

    # --- final norm only on the CLS rows (per-row LN => identical result) ---
    cls_rows = h2.reshape(B, S, D)[:, 0]                          # (B, D)
    cls_feat = pallas_layernorm(cls_rows, params["norm_g"], params["norm_b"],
                                out_dtype=jnp.float32)
    # tiny (B, D) @ (D, n_classes) head: plain JAX (N=10 << 128 lanes)
    logits = cls_feat @ params["head_w"] + params["head_b"]
    return logits


# ----------------------------------------------------------------------------
# Deterministic parameter init (synthetic weights; no checkpoint load)
# ----------------------------------------------------------------------------

def init_params(key, cfg):
    C, P, D = cfg["chans"], cfg["patch"], cfg["dim"]
    S = (cfg["img"] // P) ** 2 + 1
    mlp = cfg["mlp"]
    n_classes = cfg["n_classes"]

    def nrm(k, shape, std=0.02):
        return (jax.random.normal(k, shape, jnp.float32) * std).astype(jnp.float32)

    keys = iter(jax.random.split(key, 8 + 12 * cfg["depth"]))
    params = {
        "patch_w": nrm(next(keys), (C * P * P, D)),
        "patch_b": jnp.zeros((D,), jnp.float32),
        "cls_token": nrm(next(keys), (1, 1, D)),
        "pos_embed": nrm(next(keys), (1, S, D)),
        "norm_g": jnp.ones((D,), jnp.float32),
        "norm_b": jnp.zeros((D,), jnp.float32),
        "head_w": nrm(next(keys), (D, n_classes)),
        "head_b": jnp.zeros((n_classes,), jnp.float32),
        "blocks": [],
    }
    for _ in range(cfg["depth"]):
        params["blocks"].append({
            "ln1_g": jnp.ones((D,), jnp.float32),
            "ln1_b": jnp.zeros((D,), jnp.float32),
            "qkv_w": nrm(next(keys), (D, 3 * D)),
            "qkv_b": jnp.zeros((3 * D,), jnp.float32),
            "proj_w": nrm(next(keys), (D, D)),
            "proj_b": jnp.zeros((D,), jnp.float32),
            "ln2_g": jnp.ones((D,), jnp.float32),
            "ln2_b": jnp.zeros((D,), jnp.float32),
            "fc1_w": nrm(next(keys), (D, mlp)),
            "fc1_b": jnp.zeros((mlp,), jnp.float32),
            "fc2_w": nrm(next(keys), (mlp, D)),
            "fc2_b": jnp.zeros((D,), jnp.float32),
        })
    return params


if __name__ == "__main__":
    cfg = dict(img=32, patch=16, chans=3, dim=64, heads=4,
               depth=2, mlp=256, n_classes=10)

    key = jax.random.PRNGKey(0)
    k_params, k_x = jax.random.split(key)
    params = init_params(k_params, cfg)

    # NCHW input, like the PyTorch module
    x = jax.random.normal(k_x, (2, cfg["chans"], cfg["img"], cfg["img"]),
                          jnp.float32)

    fwd = jax.jit(functools.partial(vit_forward, cfg=cfg))
    logits = fwd(x, params)
    jax.block_until_ready(logits)
    assert logits.shape == (2, cfg["n_classes"])
    assert bool(jnp.all(jnp.isfinite(logits)))
    print("KERNEL_OK")
</pallas_src>

<mosaic_0001>
module attributes {stable_mosaic.version = 11 : i64} {
  func.func @_linear_kernel(%arg0: i32, %arg1: memref<10x64xbf16, #tpu.memory_space<vmem>>, %arg2: memref<64x64xbf16, #tpu.memory_space<vmem>>, %arg3: memref<1x64xf32, #tpu.memory_space<vmem>>, %arg4: memref<10x64xf32, #tpu.memory_space<vmem>>, %arg5: memref<10x64xf32, #tpu.memory_space<vmem>>) attributes {dimension_semantics = [#tpu.dimension_semantics<parallel>], iteration_bounds = array<i64: 1>, scalar_prefetch = 0 : i64, scratch_operands = 0 : i64, tpu.core_type = #tpu.core_type<tc>, window_params = [{transform_indices = @transform_0, window_bounds = array<i64: 10, 64>}, {pipeline_mode = #tpu.pipeline_mode<synchronous>, transform_indices = @transform_1, window_bounds = array<i64: 64, 64>}, {pipeline_mode = #tpu.pipeline_mode<synchronous>, transform_indices = @transform_2, window_bounds = array<i64: 1, 64>}, {transform_indices = @transform_3, window_bounds = array<i64: 10, 64>}, {transform_indices = @transform_4, window_bounds = array<i64: 10, 64>}]} {
    %c0 = arith.constant 0 : index
    %c0_0 = arith.constant 0 : index
    %0 = vector.load %arg1[%c0, %c0_0] : memref<10x64xbf16, #tpu.memory_space<vmem>>, vector<10x64xbf16>
    %c0_1 = arith.constant 0 : index
    %c0_2 = arith.constant 0 : index
    %1 = vector.load %arg2[%c0_1, %c0_2] : memref<64x64xbf16, #tpu.memory_space<vmem>>, vector<64x64xbf16>
    %cst = arith.constant dense<0.000000e+00> : vector<10x64xf32>
    %2 = tpu.matmul %0, %1, %cst {dimension_numbers = #tpu.dot_dimension_numbers<[1], [0], [0], [1], [0, 0, 1, 1], [], []>} : vector<10x64xbf16>, vector<64x64xbf16>, vector<10x64xf32> -> vector<10x64xf32>
    %c0_3 = arith.constant 0 : index
    %c0_4 = arith.constant 0 : index
    %3 = vector.load %arg3[%c0_3, %c0_4] : memref<1x64xf32, #tpu.memory_space<vmem>>, vector<1x64xf32>
    %4 = vector.broadcast %3 : vector<1x64xf32> to vector<10x64xf32>
    %5 = arith.addf %2, %4 : vector<10x64xf32>
    %c0_5 = arith.constant 0 : index
    %c0_6 = arith.constant 0 : index
    %6 = vector.load %arg4[%c0_5, %c0_6] : memref<10x64xf32, #tpu.memory_space<vmem>>, vector<10x64xf32>
    %7 = arith.addf %5, %6 : vector<10x64xf32>
    %c0_7 = arith.constant 0 : index
    %c0_8 = arith.constant 0 : index
    %8 = vector.load %arg5[%c0_7, %c0_8] : memref<10x64xf32, #tpu.memory_space<vmem>>, vector<10x64xf32>
    tpu.vector_store %arg5[%c0_7, %c0_8], %7 {strides = array<i32>} : memref<10x64xf32, #tpu.memory_space<vmem>>, vector<10x64xf32>,
    return
  }
  func.func @transform_0(%arg0: i32) -> (i32, i32) {
    %c0_i32 = arith.constant 0 : i32
    %c0_i32_0 = arith.constant 0 : i32
    return %arg0, %c0_i32 : i32, i32
  }
  func.func @transform_1(%arg0: i32) -> (i32, i32) {
    %c0_i32 = arith.constant 0 : i32
    %c0_i32_0 = arith.constant 0 : i32
    %c0_i32_1 = arith.constant 0 : i32
    return %c0_i32, %c0_i32_0 : i32, i32
  }
  func.func @transform_2(%arg0: i32) -> (i32, i32) {
    %c0_i32 = arith.constant 0 : i32
    %c0_i32_0 = arith.constant 0 : i32
    %c0_i32_1 = arith.constant 0 : i32
    return %c0_i32, %c0_i32_0 : i32, i32
  }
  func.func @transform_3(%arg0: i32) -> (i32, i32) {
    %c0_i32 = arith.constant 0 : i32
    %c0_i32_0 = arith.constant 0 : i32
    return %arg0, %c0_i32 : i32, i32
  }
  func.func @transform_4(%arg0: i32) -> (i32, i32) {
    %c0_i32 = arith.constant 0 : i32
    %c0_i32_0 = arith.constant 0 : i32
    return %arg0, %c0_i32 : i32, i32
  }
}

module attributes {stable_mosaic.version = 11 : i64} {
  func.func @_linear_kernel(%arg0: i32, %arg1: memref<8x768xbf16, #tpu.memory_space<vmem>>, %arg2: memref<768x64xbf16, #tpu.memory_space<vmem>>, %arg3: memref<1x64xf32, #tpu.memory_space<vmem>>, %arg4: memref<8x64xbf16, #tpu.memory_space<vmem>>) attributes {dimension_semantics = [#tpu.dimension_semantics<parallel>], iteration_bounds = array<i64: 1>, scalar_prefetch = 0 : i64, scratch_operands = 0 : i64, tpu.core_type = #tpu.core_type<tc>, window_params = [{transform_indices = @transform_0, window_bounds = array<i64: 8, 768>}, {pipeline_mode = #tpu.pipeline_mode<synchronous>, transform_indices = @transform_1, window_bounds = array<i64: 768, 64>}, {pipeline_mode = #tpu.pipeline_mode<synchronous>, transform_indices = @transform_2, window_bounds = array<i64: 1, 64>}, {transform_indices = @transform_3, window_bounds = array<i64: 8, 64>}]} {
    %c0 = arith.constant 0 : index
    %c0_0 = arith.constant 0 : index
    %0 = vector.load %arg1[%c0, %c0_0] : memref<8x768xbf16, #tpu.memory_space<vmem>>, vector<8x768xbf16>
    %c0_1 = arith.constant 0 : index
    %c0_2 = arith.constant 0 : index
    %1 = vector.load %arg2[%c0_1, %c0_2] : memref<768x64xbf16, #tpu.memory_space<vmem>>, vector<768x64xbf16>
    %cst = arith.constant dense<0.000000e+00> : vector<8x64xf32>
    %2 = tpu.matmul %0, %1, %cst {dimension_numbers = #tpu.dot_dimension_numbers<[1], [0], [0], [1], [0, 0, 1, 1], [], []>} : vector<8x768xbf16>, vector<768x64xbf16>, vector<8x64xf32> -> vector<8x64xf32>
    %c0_3 = arith.constant 0 : index
    %c0_4 = arith.constant 0 : index
    %3 = vector.load %arg3[%c0_3, %c0_4] : memref<1x64xf32, #tpu.memory_space<vmem>>, vector<1x64xf32>
    %4 = vector.broadcast %3 : vector<1x64xf32> to vector<8x64xf32>
    %5 = arith.addf %2, %4 : vector<8x64xf32>
    %6 = arith.truncf %5 : vector<8x64xf32> to vector<8x64xbf16>
    %c0_5 = arith.constant 0 : index
    %c0_6 = arith.constant 0 : index
    %7 = vector.load %arg4[%c0_5, %c0_6] : memref<8x64xbf16, #tpu.memory_space<vmem>>, vector<8x64xbf16>
    tpu.vector_store %arg4[%c0_5, %c0_6], %6 {strides = array<i32>} : memref<8x64xbf16, #tpu.memory_space<vmem>>, vector<8x64xbf16>,
    return
  }
  func.func @transform_0(%arg0: i32) -> (i32, i32) {
    %c0_i32 = arith.constant 0 : i32
    %c0_i32_0 = arith.constant 0 : i32
    return %arg0, %c0_i32 : i32, i32
  }
  func.func @transform_1(%arg0: i32) -> (i32, i32) {
    %c0_i32 = arith.constant 0 : i32
    %c0_i32_0 = arith.constant 0 : i32
    %c0_i32_1 = arith.constant 0 : i32
    return %c0_i32, %c0_i32_0 : i32, i32
  }
  func.func @transform_2(%arg0: i32) -> (i32, i32) {
    %c0_i32 = arith.constant 0 : i32
    %c0_i32_0 = arith.constant 0 : i32
    %c0_i32_1 = arith.constant 0 : i32
    return %c0_i32, %c0_i32_0 : i32, i32
  }
  func.func @transform_3(%arg0: i32) -> (i32, i32) {
    %c0_i32 = arith.constant 0 : i32
    %c0_i32_0 = arith.constant 0 : i32
    return %arg0, %c0_i32 : i32, i32
  }
}

module attributes {stable_mosaic.version = 11 : i64} {
  func.func @_attention_kernel(%arg0: i32, %arg1: i32, %arg2: memref<1x5x192xbf16, #tpu.memory_space<vmem>>, %arg3: memref<1x5x64xbf16, #tpu.memory_space<vmem>>) attributes {dimension_semantics = [#tpu.dimension_semantics<parallel>, #tpu.dimension_semantics<parallel>], iteration_bounds = array<i64: 2, 1>, scalar_prefetch = 0 : i64, scratch_operands = 0 : i64, tpu.core_type = #tpu.core_type<tc>, window_params = [{transform_indices = @transform_0, window_bounds = array<i64: 1, 5, 192>}, {transform_indices = @transform_1, window_bounds = array<i64: 1, 5, 64>}]} {
    %c0 = arith.constant 0 : index
    %c0_0 = arith.constant 0 : index
    %c0_1 = arith.constant 0 : index
    %0 = vector.load %arg2[%c0, %c0_0, %c0_1] : memref<1x5x192xbf16, #tpu.memory_space<vmem>>, vector<1x5x16xbf16>
    %1 = vector.shape_cast %0 : vector<1x5x16xbf16> to vector<5x16xbf16>
    %c0_2 = arith.constant 0 : index
    %c0_3 = arith.constant 0 : index
    %c64 = arith.constant 64 : index
    %2 = vector.load %arg2[%c0_2, %c0_3, %c64] : memref<1x5x192xbf16, #tpu.memory_space<vmem>>, vector<1x5x16xbf16>
    %3 = vector.shape_cast %2 : vector<1x5x16xbf16> to vector<5x16xbf16>
    %c0_4 = arith.constant 0 : index
    %c0_5 = arith.constant 0 : index
    %c128 = arith.constant 128 : index
    %4 = vector.load %arg2[%c0_4, %c0_5, %c128] : memref<1x5x192xbf16, #tpu.memory_space<vmem>>, vector<1x5x16xbf16>
    %5 = vector.shape_cast %4 : vector<1x5x16xbf16> to vector<5x16xbf16>
    %cst = arith.constant dense<0.000000e+00> : vector<5x5xf32>
    %6 = tpu.matmul %1, %3, %cst {dimension_numbers = #tpu.dot_dimension_numbers<[1], [1], [0], [0], [0, 0, 1, 0], [], []>} : vector<5x16xbf16>, vector<5x16xbf16>, vector<5x5xf32> -> vector<5x5xf32>
    %cst_6 = arith.constant 2.500000e-01 : f32
    %7 = vector.broadcast %cst_6 : f32 to vector<5x5xf32>
    %8 = arith.mulf %6, %7 : vector<5x5xf32>
    %cst_7 = arith.constant dense<0xFF800000> : vector<5xf32>
    %9 = vector.multi_reduction <maximumf>, %8, %cst_7 [1] : vector<5x5xf32> to vector<5xf32>
    %10 = vector.shape_cast %9 : vector<5xf32> to vector<5x1xf32>
    %11 = vector.broadcast %10 : vector<5x1xf32> to vector<5x5xf32>
    %12 = arith.subf %8, %11 : vector<5x5xf32>
    %13 = math.exp %12 : vector<5x5xf32>
    %cst_8 = arith.constant dense<0.000000e+00> : vector<5xf32>
    %14 = vector.multi_reduction <add>, %13, %cst_8 [1] : vector<5x5xf32> to vector<5xf32>
    %15 = vector.shape_cast %14 : vector<5xf32> to vector<5x1xf32>
    %16 = tpu.reciprocal %15 {approx = true} : vector<5x1xf32> -> vector<5x1xf32>
    %17 = vector.broadcast %16 : vector<5x1xf32> to vector<5x5xf32>
    %18 = arith.mulf %13, %17 : vector<5x5xf32>
    %19 = arith.truncf %18 : vector<5x5xf32> to vector<5x5xbf16>
    %cst_9 = arith.constant dense<0.000000e+00> : vector<5x16xf32>
    %20 = tpu.matmul %19, %5, %cst_9 {dimension_numbers = #tpu.dot_dimension_numbers<[1], [0], [0], [1], [0, 0, 1, 1], [], []>} : vector<5x5xbf16>, vector<5x16xbf16>, vector<5x16xf32> -> vector<5x16xf32>
    %21 = arith.truncf %20 : vector<5x16xf32> to vector<5x16xbf16>
    %c0_10 = arith.constant 0 : index
    %c0_11 = arith.constant 0 : index
    %c16 = arith.constant 16 : index
    %22 = vector.load %arg2[%c0_10, %c0_11, %c16] : memref<1x5x192xbf16, #tpu.memory_space<vmem>>, vector<1x5x16xbf16>
    %23 = vector.shape_cast %22 : vector<1x5x16xbf16> to vector<5x16xbf16>
    %c0_12 = arith.constant 0 : index
    %c0_13 = arith.constant 0 : index
    %c80 = arith.constant 80 : index
    %24 = vector.load %arg2[%c0_12, %c0_13, %c80] : memref<1x5x192xbf16, #tpu.memory_space<vmem>>, vector<1x5x16xbf16>
    %25 = vector.shape_cast %24 : vector<1x5x16xbf16> to vector<5x16xbf16>
    %c0_14 = arith.constant 0 : index
    %c0_15 = arith.constant 0 : index
    %c144 = arith.constant 144 : index
    %26 = vector.load %arg2[%c0_14, %c0_15, %c144] : memref<1x5x192xbf16, #tpu.memory_space<vmem>>, vector<1x5x16xbf16>
    %27 = vector.shape_cast %26 : vector<1x5x16xbf16> to vector<5x16xbf16>
    %cst_16 = arith.constant dense<0.000000e+00> : vector<5x5xf32>
    %28 = tpu.matmul %23, %25, %cst_16 {dimension_numbers = #tpu.dot_dimension_numbers<[1], [1], [0], [0], [0, 0, 1, 0], [], []>} : vector<5x16xbf16>, vector<5x16xbf16>, vector<5x5xf32> -> vector<5x5xf32>
    %cst_17 = arith.constant 2.500000e-01 : f32
    %29 = vector.broadcast %cst_17 : f32 to vector<5x5xf32>
    %30 = arith.mulf %28, %29 : vector<5x5xf32>
    %cst_18 = arith.constant dense<0xFF800000> : vector<5xf32>
    %31 = vector.multi_reduction <maximumf>, %30, %cst_18 [1] : vector<5x5xf32> to vector<5xf32>
    %32 = vector.shape_cast %31 : vector<5xf32> to vector<5x1xf32>
    %33 = vector.broadcast %32 : vector<5x1xf32> to vector<5x5xf32>
    %34 = arith.subf %30, %33 : vector<5x5xf32>
    %35 = math.exp %34 : vector<5x5xf32>
    %cst_19 = arith.constant dense<0.000000e+00> : vector<5xf32>
    %36 = vector.multi_reduction <add>, %35, %cst_19 [1] : vector<5x5xf32> to vector<5xf32>
    %37 = vector.shape_cast %36 : vector<5xf32> to vector<5x1xf32>
    %38 = tpu.reciprocal %37 {approx = true} : vector<5x1xf32> -> vector<5x1xf32>
    %39 = vector.broadcast %38 : vector<5x1xf32> to vector<5x5xf32>
    %40 = arith.mulf %35, %39 : vector<5x5xf32>
    %41 = arith.truncf %40 : vector<5x5xf32> to vector<5x5xbf16>
    %cst_20 = arith.constant dense<0.000000e+00> : vector<5x16xf32>
    %42 = tpu.matmul %41, %27, %cst_20 {dimension_numbers = #tpu.dot_dimension_numbers<[1], [0], [0], [1], [0, 0, 1, 1], [], []>} : vector<5x5xbf16>, vector<5x16xbf16>, vector<5x16xf32> -> vector<5x16xf32>
    %43 = arith.truncf %42 : vector<5x16xf32> to vector<5x16xbf16>
    %c0_21 = arith.constant 0 : index
    %c0_22 = arith.constant 0 : index
    %c32 = arith.constant 32 : index
    %44 = vector.load %arg2[%c0_21, %c0_22, %c32] : memref<1x5x192xbf16, #tpu.memory_space<vmem>>, vector<1x5x16xbf16>
    %45 = vector.shape_cast %44 : vector<1x5x16xbf16> to vector<5x16xbf16>
    %c0_23 = arith.constant 0 : index
    %c0_24 = arith.constant 0 : index
    %c96 = arith.constant 96 : index
    %46 = vector.load %arg2[%c0_23, %c0_24, %c96] : memref<1x5x192xbf16, #tpu.memory_space<vmem>>, vector<1x5x16xbf16>
    %47 = vector.shape_cast %46 : vector<1x5x16xbf16> to vector<5x16xbf16>
    %c0_25 = arith.constant 0 : index
    %c0_26 = arith.constant 0 : index
    %c160 = arith.constant 160 : index
    %48 = vector.load %arg2[%c0_25, %c0_26, %c160] : memref<1x5x192xbf16, #tpu.memory_space<vmem>>, vector<1x5x16xbf16>
    %49 = vector.shape_cast %48 : vector<1x5x16xbf16> to vector<5x16xbf16>
    %cst_27 = arith.constant dense<0.000000e+00> : vector<5x5xf32>
    %50 = tpu.matmul %45, %47, %cst_27 {dimension_numbers = #tpu.dot_dimension_numbers<[1], [1], [0], [0], [0, 0, 1, 0], [], []>} : vector<5x16xbf16>, vector<5x16xbf16>, vector<5x5xf32> -> vector<5x5xf32>
    %cst_28 = arith.constant 2.500000e-01 : f32
    %51 = vector.broadcast %cst_28 : f32 to vector<5x5xf32>
    %52 = arith.mulf %50, %51 : vector<5x5xf32>
    %cst_29 = arith.constant dense<0xFF800000> : vector<5xf32>
    %53 = vector.multi_reduction <maximumf>, %52, %cst_29 [1] : vector<5x5xf32> to vector<5xf32>
    %54 = vector.shape_cast %53 : vector<5xf32> to vector<5x1xf32>
    %55 = vector.broadcast %54 : vector<5x1xf32> to vector<5x5xf32>
    %56 = arith.subf %52, %55 : vector<5x5xf32>
    %57 = math.exp %56 : vector<5x5xf32>
    %cst_30 = arith.constant dense<0.000000e+00> : vector<5xf32>
    %58 = vector.multi_reduction <add>, %57, %cst_30 [1] : vector<5x5xf32> to vector<5xf32>
    %59 = vector.shape_cast %58 : vector<5xf32> to vector<5x1xf32>
    %60 = tpu.reciprocal %59 {approx = true} : vector<5x1xf32> -> vector<5x1xf32>
    %61 = vector.broadcast %60 : vector<5x1xf32> to vector<5x5xf32>
    %62 = arith.mulf %57, %61 : vector<5x5xf32>
    %63 = arith.truncf %62 : vector<5x5xf32> to vector<5x5xbf16>
    %cst_31 = arith.constant dense<0.000000e+00> : vector<5x16xf32>
    %64 = tpu.matmul %63, %49, %cst_31 {dimension_numbers = #tpu.dot_dimension_numbers<[1], [0], [0], [1], [0, 0, 1, 1], [], []>} : vector<5x5xbf16>, vector<5x16xbf16>, vector<5x16xf32> -> vector<5x16xf32>
    %65 = arith.truncf %64 : vector<5x16xf32> to vector<5x16xbf16>
    %c0_32 = arith.constant 0 : index
    %c0_33 = arith.constant 0 : index
    %c48 = arith.constant 48 : index
    %66 = vector.load %arg2[%c0_32, %c0_33, %c48] : memref<1x5x192xbf16, #tpu.memory_space<vmem>>, vector<1x5x16xbf16>
    %67 = vector.shape_cast %66 : vector<1x5x16xbf16> to vector<5x16xbf16>
    %c0_34 = arith.constant 0 : index
    %c0_35 = arith.constant 0 : index
    %c112 = arith.constant 112 : index
    %68 = vector.load %arg2[%c0_34, %c0_35, %c112] : memref<1x5x192xbf16, #tpu.memory_space<vmem>>, vector<1x5x16xbf16>
    %69 = vector.shape_cast %68 : vector<1x5x16xbf16> to vector<5x16xbf16>
    %c0_36 = arith.constant 0 : index
    %c0_37 = arith.constant 0 : index
    %c176 = arith.constant 176 : index
    %70 = vector.load %arg2[%c0_36, %c0_37, %c176] : memref<1x5x192xbf16, #tpu.memory_space<vmem>>, vector<1x5x16xbf16>
    %71 = vector.shape_cast %70 : vector<1x5x16xbf16> to vector<5x16xbf16>
    %cst_38 = arith.constant dense<0.000000e+00> : vector<5x5xf32>
    %72 = tpu.matmul %67, %69, %cst_38 {dimension_numbers = #tpu.dot_dimension_numbers<[1], [1], [0], [0], [0, 0, 1, 0], [], []>} : vector<5x16xbf16>, vector<5x16xbf16>, vector<5x5xf32> -> vector<5x5xf32>
    %cst_39 = arith.constant 2.500000e-01 : f32
    %73 = vector.broadcast %cst_39 : f32 to vector<5x5xf32>
    %74 = arith.mulf %72, %73 : vector<5x5xf32>
    %cst_40 = arith.constant dense<0xFF800000> : vector<5xf32>
    %75 = vector.multi_reduction <maximumf>, %74, %cst_40 [1] : vector<5x5xf32> to vector<5xf32>
    %76 = vector.shape_cast %75 : vector<5xf32> to vector<5x1xf32>
    %77 = vector.broadcast %76 : vector<5x1xf32> to vector<5x5xf32>
    %78 = arith.subf %74, %77 : vector<5x5xf32>
    %79 = math.exp %78 : vector<5x5xf32>
    %cst_41 = arith.constant dense<0.000000e+00> : vector<5xf32>
    %80 = vector.multi_reduction <add>, %79, %cst_41 [1] : vector<5x5xf32> to vector<5xf32>
    %81 = vector.shape_cast %80 : vector<5xf32> to vector<5x1xf32>
    %82 = tpu.reciprocal %81 {approx = true} : vector<5x1xf32> -> vector<5x1xf32>
    %83 = vector.broadcast %82 : vector<5x1xf32> to vector<5x5xf32>
    %84 = arith.mulf %79, %83 : vector<5x5xf32>
    %85 = arith.truncf %84 : vector<5x5xf32> to vector<5x5xbf16>
    %cst_42 = arith.constant dense<0.000000e+00> : vector<5x16xf32>
    %86 = tpu.matmul %85, %71, %cst_42 {dimension_numbers = #tpu.dot_dimension_numbers<[1], [0], [0], [1], [0, 0, 1, 1], [], []>} : vector<5x5xbf16>, vector<5x16xbf16>, vector<5x16xf32> -> vector<5x16xf32>
    %87 = arith.truncf %86 : vector<5x16xf32> to vector<5x16xbf16>
    %88 = tpu.concatenate %21, %43, %65, %87 in 1 : vector<5x16xbf16>, vector<5x16xbf16>, vector<5x16xbf16>, vector<5x16xbf16> -> vector<5x64xbf16>
    %c0_43 = arith.constant 0 : index
    %c0_44 = arith.constant 0 : index
    %c0_45 = arith.constant 0 : index
    %89 = vector.load %arg3[%c0_43, %c0_44, %c0_45] : memref<1x5x64xbf16, #tpu.memory_space<vmem>>, vector<1x5x64xbf16>
    %90 = vector.shape_cast %89 : vector<1x5x64xbf16> to vector<5x64xbf16>
    %91 = vector.shape_cast %88 : vector<5x64xbf16> to vector<1x5x64xbf16>
    tpu.vector_store %arg3[%c0_43, %c0_44, %c0_45], %91 {strides = array<i32>} : memref<1x5x64xbf16, #tpu.memory_space<vmem>>, vector<1x5x64xbf16>,
    return
  }
  func.func @transform_0(%arg0: i32, %arg1: i32) -> (i32, i32, i32) {
    %c0_i32 = arith.constant 0 : i32
    %c0_i32_0 = arith.constant 0 : i32
    %c0_i32_1 = arith.constant 0 : i32
    return %arg0, %c0_i32, %c0_i32_0 : i32, i32, i32
  }
  func.func @transform_1(%arg0: i32, %arg1: i32) -> (i32, i32, i32) {
    %c0_i32 = arith.constant 0 : i32
    %c0_i32_0 = arith.constant 0 : i32
    return %arg0, %c0_i32, %arg1 : i32, i32, i32
  }
}

module attributes {stable_mosaic.version = 11 : i64} {
  func.func @_ln_linear_kernel(%arg0: i32, %arg1: memref<10x64xf32, #tpu.memory_space<vmem>>, %arg2: memref<1x64xf32, #tpu.memory_space<vmem>>, %arg3: memref<1x64xf32, #tpu.memory_space<vmem>>, %arg4: memref<64x192xbf16, #tpu.memory_space<vmem>>, %arg5: memref<1x192xf32, #tpu.memory_space<vmem>>, %arg6: memref<10x192xbf16, #tpu.memory_space<vmem>>) attributes {dimension_semantics = [#tpu.dimension_semantics<parallel>], iteration_bounds = array<i64: 1>, scalar_prefetch = 0 : i64, scratch_operands = 0 : i64, tpu.core_type = #tpu.core_type<tc>, window_params = [{transform_indices = @transform_0, window_bounds = array<i64: 10, 64>}, {pipeline_mode = #tpu.pipeline_mode<synchronous>, transform_indices = @transform_1, window_bounds = array<i64: 1, 64>}, {pipeline_mode = #tpu.pipeline_mode<synchronous>, transform_indices = @transform_2, window_bounds = array<i64: 1, 64>}, {pipeline_mode = #tpu.pipeline_mode<synchronous>, transform_indices = @transform_3, window_bounds = array<i64: 64, 192>}, {pipeline_mode = #tpu.pipeline_mode<synchronous>, transform_indices = @transform_4, window_bounds = array<i64: 1, 192>}, {transform_indices = @transform_5, window_bounds = array<i64: 10, 192>}]} {
    %c0 = arith.constant 0 : index
    %c0_0 = arith.constant 0 : index
    %0 = vector.load %arg1[%c0, %c0_0] : memref<10x64xf32, #tpu.memory_space<vmem>>, vector<10x64xf32>
    %cst = arith.constant dense<0.000000e+00> : vector<10xf32>
    %1 = vector.multi_reduction <add>, %0, %cst [1] : vector<10x64xf32> to vector<10xf32>
    %2 = vector.shape_cast %1 : vector<10xf32> to vector<10x1xf32>
    %cst_1 = arith.constant 6.400000e+01 : f32
    %3 = vector.broadcast %cst_1 : f32 to vector<10x1xf32>
    %4 = arith.divf %2, %3 : vector<10x1xf32>
    %5 = vector.broadcast %4 : vector<10x1xf32> to vector<10x64xf32>
    %6 = arith.subf %0, %5 : vector<10x64xf32>
    %7 = arith.mulf %6, %6 : vector<10x64xf32>
    %cst_2 = arith.constant dense<0.000000e+00> : vector<10xf32>
    %8 = vector.multi_reduction <add>, %7, %cst_2 [1] : vector<10x64xf32> to vector<10xf32>
    %9 = vector.shape_cast %8 : vector<10xf32> to vector<10x1xf32>
    %cst_3 = arith.constant 6.400000e+01 : f32
    %10 = vector.broadcast %cst_3 : f32 to vector<10x1xf32>
    %11 = arith.divf %9, %10 : vector<10x1xf32>
    %cst_4 = arith.constant 9.99999997E-7 : f32
    %12 = vector.broadcast %cst_4 : f32 to vector<10x1xf32>
    %13 = arith.addf %11, %12 : vector<10x1xf32>
    %14 = math.rsqrt %13 : vector<10x1xf32>
    %15 = vector.broadcast %14 : vector<10x1xf32> to vector<10x64xf32>
    %16 = arith.mulf %6, %15 : vector<10x64xf32>
    %c0_5 = arith.constant 0 : index
    %c0_6 = arith.constant 0 : index
    %17 = vector.load %arg2[%c0_5, %c0_6] : memref<1x64xf32, #tpu.memory_space<vmem>>, vector<1x64xf32>
    %18 = vector.broadcast %17 : vector<1x64xf32> to vector<10x64xf32>
    %19 = arith.mulf %16, %18 : vector<10x64xf32>
    %c0_7 = arith.constant 0 : index
    %c0_8 = arith.constant 0 : index
    %20 = vector.load %arg3[%c0_7, %c0_8] : memref<1x64xf32, #tpu.memory_space<vmem>>, vector<1x64xf32>
    %21 = vector.broadcast %20 : vector<1x64xf32> to vector<10x64xf32>
    %22 = arith.addf %19, %21 : vector<10x64xf32>
    %23 = arith.truncf %22 : vector<10x64xf32> to vector<10x64xbf16>
    %c0_9 = arith.constant 0 : index
    %c0_10 = arith.constant 0 : index
    %24 = vector.load %arg4[%c0_9, %c0_10] : memref<64x192xbf16, #tpu.memory_space<vmem>>, vector<64x192xbf16>
    %cst_11 = arith.constant dense<0.000000e+00> : vector<10x192xf32>
    %25 = tpu.matmul %23, %24, %cst_11 {dimension_numbers = #tpu.dot_dimension_numbers<[1], [0], [0], [1], [0, 0, 1, 1], [], []>} : vector<10x64xbf16>, vector<64x192xbf16>, vector<10x192xf32> -> vector<10x192xf32>
    %c0_12 = arith.constant 0 : index
    %c0_13 = arith.constant 0 : index
    %26 = vector.load %arg5[%c0_12, %c0_13] : memref<1x192xf32, #tpu.memory_space<vmem>>, vector<1x192xf32>
    %27 = vector.broadcast %26 : vector<1x192xf32> to vector<10x192xf32>
    %28 = arith.addf %25, %27 : vector<10x192xf32>
    %29 = arith.truncf %28 : vector<10x192xf32> to vector<10x192xbf16>
    %c0_14 = arith.constant 0 : index
    %c0_15 = arith.constant 0 : index
    %30 = vector.load %arg6[%c0_14, %c0_15] : memref<10x192xbf16, #tpu.memory_space<vmem>>, vector<10x192xbf16>
    tpu.vector_store %arg6[%c0_14, %c0_15], %29 {strides = array<i32>} : memref<10x192xbf16, #tpu.memory_space<vmem>>, vector<10x192xbf16>,
    return
  }
  func.func @transform_0(%arg0: i32) -> (i32, i32) {
    %c0_i32 = arith.constant 0 : i32
    %c0_i32_0 = arith.constant 0 : i32
    return %arg0, %c0_i32 : i32, i32
  }
  func.func @transform_1(%arg0: i32) -> (i32, i32) {
    %c0_i32 = arith.constant 0 : i32
    %c0_i32_0 = arith.constant 0 : i32
    %c0_i32_1 = arith.constant 0 : i32
    return %c0_i32, %c0_i32_0 : i32, i32
  }
  func.func @transform_2(%arg0: i32) -> (i32, i32) {
    %c0_i32 = arith.constant 0 : i32
    %c0_i32_0 = arith.constant 0 : i32
    %c0_i32_1 = arith.constant 0 : i32
    return %c0_i32, %c0_i32_0 : i32, i32
  }
  func.func @transform_3(%arg0: i32) -> (i32, i32) {
    %c0_i32 = arith.constant 0 : i32
    %c0_i32_0 = arith.constant 0 : i32
    %c0_i32_1 = arith.constant 0 : i32
    return %c0_i32, %c0_i32_0 : i32, i32
  }
  func.func @transform_4(%arg0: i32) -> (i32, i32) {
    %c0_i32 = arith.constant 0 : i32
    %c0_i32_0 = arith.constant 0 : i32
    %c0_i32_1 = arith.constant 0 : i32
    return %c0_i32, %c0_i32_0 : i32, i32
  }
  func.func @transform_5(%arg0: i32) -> (i32, i32) {
    %c0_i32 = arith.constant 0 : i32
    %c0_i32_0 = arith.constant 0 : i32
    return %arg0, %c0_i32 : i32, i32
  }
}

module attributes {stable_mosaic.version = 11 : i64} {
  func.func @_ln_linear_kernel(%arg0: i32, %arg1: memref<10x64xf32, #tpu.memory_space<vmem>>, %arg2: memref<1x64xf32, #tpu.memory_space<vmem>>, %arg3: memref<1x64xf32, #tpu.memory_space<vmem>>, %arg4: memref<64x256xbf16, #tpu.memory_space<vmem>>, %arg5: memref<1x256xf32, #tpu.memory_space<vmem>>, %arg6: memref<10x256xbf16, #tpu.memory_space<vmem>>) attributes {dimension_semantics = [#tpu.dimension_semantics<parallel>], iteration_bounds = array<i64: 1>, scalar_prefetch = 0 : i64, scratch_operands = 0 : i64, tpu.core_type = #tpu.core_type<tc>, window_params = [{transform_indices = @transform_0, window_bounds = array<i64: 10, 64>}, {pipeline_mode = #tpu.pipeline_mode<synchronous>, transform_indices = @transform_1, window_bounds = array<i64: 1, 64>}, {pipeline_mode = #tpu.pipeline_mode<synchronous>, transform_indices = @transform_2, window_bounds = array<i64: 1, 64>}, {pipeline_mode = #tpu.pipeline_mode<synchronous>, transform_indices = @transform_3, window_bounds = array<i64: 64, 256>}, {pipeline_mode = #tpu.pipeline_mode<synchronous>, transform_indices = @transform_4, window_bounds = array<i64: 1, 256>}, {transform_indices = @transform_5, window_bounds = array<i64: 10, 256>}]} {
    %c0 = arith.constant 0 : index
    %c0_0 = arith.constant 0 : index
    %0 = vector.load %arg1[%c0, %c0_0] : memref<10x64xf32, #tpu.memory_space<vmem>>, vector<10x64xf32>
    %cst = arith.constant dense<0.000000e+00> : vector<10xf32>
    %1 = vector.multi_reduction <add>, %0, %cst [1] : vector<10x64xf32> to vector<10xf32>
    %2 = vector.shape_cast %1 : vector<10xf32> to vector<10x1xf32>
    %cst_1 = arith.constant 6.400000e+01 : f32
    %3 = vector.broadcast %cst_1 : f32 to vector<10x1xf32>
    %4 = arith.divf %2, %3 : vector<10x1xf32>
    %5 = vector.broadcast %4 : vector<10x1xf32> to vector<10x64xf32>
    %6 = arith.subf %0, %5 : vector<10x64xf32>
    %7 = arith.mulf %6, %6 : vector<10x64xf32>
    %cst_2 = arith.constant dense<0.000000e+00> : vector<10xf32>
    %8 = vector.multi_reduction <add>, %7, %cst_2 [1] : vector<10x64xf32> to vector<10xf32>
    %9 = vector.shape_cast %8 : vector<10xf32> to vector<10x1xf32>
    %cst_3 = arith.constant 6.400000e+01 : f32
    %10 = vector.broadcast %cst_3 : f32 to vector<10x1xf32>
    %11 = arith.divf %9, %10 : vector<10x1xf32>
    %cst_4 = arith.constant 9.99999997E-7 : f32
    %12 = vector.broadcast %cst_4 : f32 to vector<10x1xf32>
    %13 = arith.addf %11, %12 : vector<10x1xf32>
    %14 = math.rsqrt %13 : vector<10x1xf32>
    %15 = vector.broadcast %14 : vector<10x1xf32> to vector<10x64xf32>
    %16 = arith.mulf %6, %15 : vector<10x64xf32>
    %c0_5 = arith.constant 0 : index
    %c0_6 = arith.constant 0 : index
    %17 = vector.load %arg2[%c0_5, %c0_6] : memref<1x64xf32, #tpu.memory_space<vmem>>, vector<1x64xf32>
    %18 = vector.broadcast %17 : vector<1x64xf32> to vector<10x64xf32>
    %19 = arith.mulf %16, %18 : vector<10x64xf32>
    %c0_7 = arith.constant 0 : index
    %c0_8 = arith.constant 0 : index
    %20 = vector.load %arg3[%c0_7, %c0_8] : memref<1x64xf32, #tpu.memory_space<vmem>>, vector<1x64xf32>
    %21 = vector.broadcast %20 : vector<1x64xf32> to vector<10x64xf32>
    %22 = arith.addf %19, %21 : vector<10x64xf32>
    %23 = arith.truncf %22 : vector<10x64xf32> to vector<10x64xbf16>
    %c0_9 = arith.constant 0 : index
    %c0_10 = arith.constant 0 : index
    %24 = vector.load %arg4[%c0_9, %c0_10] : memref<64x256xbf16, #tpu.memory_space<vmem>>, vector<64x256xbf16>
    %cst_11 = arith.constant dense<0.000000e+00> : vector<10x256xf32>
    %25 = tpu.matmul %23, %24, %cst_11 {dimension_numbers = #tpu.dot_dimension_numbers<[1], [0], [0], [1], [0, 0, 1, 1], [], []>} : vector<10x64xbf16>, vector<64x256xbf16>, vector<10x256xf32> -> vector<10x256xf32>
    %c0_12 = arith.constant 0 : index
    %c0_13 = arith.constant 0 : index
    %26 = vector.load %arg5[%c0_12, %c0_13] : memref<1x256xf32, #tpu.memory_space<vmem>>, vector<1x256xf32>
    %27 = vector.broadcast %26 : vector<1x256xf32> to vector<10x256xf32>
    %28 = arith.addf %25, %27 : vector<10x256xf32>
    %cst_14 = arith.constant 5.000000e-01 : f32
    %29 = vector.broadcast %cst_14 : f32 to vector<10x256xf32>
    %30 = arith.mulf %29, %28 : vector<10x256xf32>
    %cst_15 = arith.constant 4.471500e-02 : f32
    %31 = vector.broadcast %cst_15 : f32 to vector<10x256xf32>
    %32 = arith.mulf %31, %28 : vector<10x256xf32>
    %33 = arith.mulf %32, %28 : vector<10x256xf32>
    %34 = arith.mulf %33, %28 : vector<10x256xf32>
    %35 = arith.addf %28, %34 : vector<10x256xf32>
    %cst_16 = arith.constant 0.797884583 : f32
    %36 = vector.broadcast %cst_16 : f32 to vector<10x256xf32>
    %37 = arith.mulf %36, %35 : vector<10x256xf32>
    %38 = math.tanh %37 : vector<10x256xf32>
    %cst_17 = arith.constant 1.000000e+00 : f32
    %39 = vector.broadcast %cst_17 : f32 to vector<10x256xf32>
    %40 = arith.addf %39, %38 : vector<10x256xf32>
    %41 = arith.mulf %30, %40 : vector<10x256xf32>
    %42 = arith.truncf %41 : vector<10x256xf32> to vector<10x256xbf16>
    %c0_18 = arith.constant 0 : index
    %c0_19 = arith.constant 0 : index
    %43 = vector.load %arg6[%c0_18, %c0_19] : memref<10x256xbf16, #tpu.memory_space<vmem>>, vector<10x256xbf16>
    tpu.vector_store %arg6[%c0_18, %c0_19], %42 {strides = array<i32>} : memref<10x256xbf16, #tpu.memory_space<vmem>>, vector<10x256xbf16>,
    return
  }
  func.func @transform_0(%arg0: i32) -> (i32, i32) {
    %c0_i32 = arith.constant 0 : i32
    %c0_i32_0 = arith.constant 0 : i32
    return %arg0, %c0_i32 : i32, i32
  }
  func.func @transform_1(%arg0: i32) -> (i32, i32) {
    %c0_i32 = arith.constant 0 : i32
    %c0_i32_0 = arith.constant 0 : i32
    %c0_i32_1 = arith.constant 0 : i32
    return %c0_i32, %c0_i32_0 : i32, i32
  }
  func.func @transform_2(%arg0: i32) -> (i32, i32) {
    %c0_i32 = arith.constant 0 : i32
    %c0_i32_0 = arith.constant 0 : i32
    %c0_i32_1 = arith.constant 0 : i32
    return %c0_i32, %c0_i32_0 : i32, i32
  }
  func.func @transform_3(%arg0: i32) -> (i32, i32) {
    %c0_i32 = arith.constant 0 : i32
    %c0_i32_0 = arith.constant 0 : i32
    %c0_i32_1 = arith.constant 0 : i32
    return %c0_i32, %c0_i32_0 : i32, i32
  }
  func.func @transform_4(%arg0: i32) -> (i32, i32) {
    %c0_i32 = arith.constant 0 : i32
    %c0_i32_0 = arith.constant 0 : i32
    %c0_i32_1 = arith.constant 0 : i32
    return %c0_i32, %c0_i32_0 : i32, i32
  }
  func.func @transform_5(%arg0: i32) -> (i32, i32) {
    %c0_i32 = arith.constant 0 : i32
    %c0_i32_0 = arith.constant 0 : i32
    return %arg0, %c0_i32 : i32, i32
  }
}

module attributes {stable_mosaic.version = 11 : i64} {
  func.func @_linear_kernel(%arg0: i32, %arg1: memref<10x256xbf16, #tpu.memory_space<vmem>>, %arg2: memref<256x64xbf16, #tpu.memory_space<vmem>>, %arg3: memref<1x64xf32, #tpu.memory_space<vmem>>, %arg4: memref<10x64xf32, #tpu.memory_space<vmem>>, %arg5: memref<10x64xf32, #tpu.memory_space<vmem>>) attributes {dimension_semantics = [#tpu.dimension_semantics<parallel>], iteration_bounds = array<i64: 1>, scalar_prefetch = 0 : i64, scratch_operands = 0 : i64, tpu.core_type = #tpu.core_type<tc>, window_params = [{transform_indices = @transform_0, window_bounds = array<i64: 10, 256>}, {pipeline_mode = #tpu.pipeline_mode<synchronous>, transform_indices = @transform_1, window_bounds = array<i64: 256, 64>}, {pipeline_mode = #tpu.pipeline_mode<synchronous>, transform_indices = @transform_2, window_bounds = array<i64: 1, 64>}, {transform_indices = @transform_3, window_bounds = array<i64: 10, 64>}, {transform_indices = @transform_4, window_bounds = array<i64: 10, 64>}]} {
    %c0 = arith.constant 0 : index
    %c0_0 = arith.constant 0 : index
    %0 = vector.load %arg1[%c0, %c0_0] : memref<10x256xbf16, #tpu.memory_space<vmem>>, vector<10x256xbf16>
    %c0_1 = arith.constant 0 : index
    %c0_2 = arith.constant 0 : index
    %1 = vector.load %arg2[%c0_1, %c0_2] : memref<256x64xbf16, #tpu.memory_space<vmem>>, vector<256x64xbf16>
    %cst = arith.constant dense<0.000000e+00> : vector<10x64xf32>
    %2 = tpu.matmul %0, %1, %cst {dimension_numbers = #tpu.dot_dimension_numbers<[1], [0], [0], [1], [0, 0, 1, 1], [], []>} : vector<10x256xbf16>, vector<256x64xbf16>, vector<10x64xf32> -> vector<10x64xf32>
    %c0_3 = arith.constant 0 : index
    %c0_4 = arith.constant 0 : index
    %3 = vector.load %arg3[%c0_3, %c0_4] : memref<1x64xf32, #tpu.memory_space<vmem>>, vector<1x64xf32>
    %4 = vector.broadcast %3 : vector<1x64xf32> to vector<10x64xf32>
    %5 = arith.addf %2, %4 : vector<10x64xf32>
    %c0_5 = arith.constant 0 : index
    %c0_6 = arith.constant 0 : index
    %6 = vector.load %arg4[%c0_5, %c0_6] : memref<10x64xf32, #tpu.memory_space<vmem>>, vector<10x64xf32>
    %7 = arith.addf %5, %6 : vector<10x64xf32>
    %c0_7 = arith.constant 0 : index
    %c0_8 = arith.constant 0 : index
    %8 = vector.load %arg5[%c0_7, %c0_8] : memref<10x64xf32, #tpu.memory_space<vmem>>, vector<10x64xf32>
    tpu.vector_store %arg5[%c0_7, %c0_8], %7 {strides = array<i32>} : memref<10x64xf32, #tpu.memory_space<vmem>>, vector<10x64xf32>,
    return
  }
  func.func @transform_0(%arg0: i32) -> (i32, i32) {
    %c0_i32 = arith.constant 0 : i32
    %c0_i32_0 = arith.constant 0 : i32
    return %arg0, %c0_i32 : i32, i32
  }
  func.func @transform_1(%arg0: i32) -> (i32, i32) {
    %c0_i32 = arith.constant 0 : i32
    %c0_i32_0 = arith.constant 0 : i32
    %c0_i32_1 = arith.constant 0 : i32
    return %c0_i32, %c0_i32_0 : i32, i32
  }
  func.func @transform_2(%arg0: i32) -> (i32, i32) {
    %c0_i32 = arith.constant 0 : i32
    %c0_i32_0 = arith.constant 0 : i32
    %c0_i32_1 = arith.constant 0 : i32
    return %c0_i32, %c0_i32_0 : i32, i32
  }
  func.func @transform_3(%arg0: i32) -> (i32, i32) {
    %c0_i32 = arith.constant 0 : i32
    %c0_i32_0 = arith.constant 0 : i32
    return %arg0, %c0_i32 : i32, i32
  }
  func.func @transform_4(%arg0: i32) -> (i32, i32) {
    %c0_i32 = arith.constant 0 : i32
    %c0_i32_0 = arith.constant 0 : i32
    return %arg0, %c0_i32 : i32, i32
  }
}

module attributes {stable_mosaic.version = 11 : i64} {
  func.func @_layernorm_kernel(%arg0: i32, %arg1: memref<2x64xf32, #tpu.memory_space<vmem>>, %arg2: memref<1x64xf32, #tpu.memory_space<vmem>>, %arg3: memref<1x64xf32, #tpu.memory_space<vmem>>, %arg4: memref<2x64xf32, #tpu.memory_space<vmem>>) attributes {dimension_semantics = [#tpu.dimension_semantics<parallel>], iteration_bounds = array<i64: 1>, scalar_prefetch = 0 : i64, scratch_operands = 0 : i64, tpu.core_type = #tpu.core_type<tc>, window_params = [{transform_indices = @transform_0, window_bounds = array<i64: 2, 64>}, {pipeline_mode = #tpu.pipeline_mode<synchronous>, transform_indices = @transform_1, window_bounds = array<i64: 1, 64>}, {pipeline_mode = #tpu.pipeline_mode<synchronous>, transform_indices = @transform_2, window_bounds = array<i64: 1, 64>}, {transform_indices = @transform_3, window_bounds = array<i64: 2, 64>}]} {
    %c0 = arith.constant 0 : index
    %c0_0 = arith.constant 0 : index
    %0 = vector.load %arg1[%c0, %c0_0] : memref<2x64xf32, #tpu.memory_space<vmem>>, vector<2x64xf32>
    %cst = arith.constant dense<0.000000e+00> : vector<2xf32>
    %1 = vector.multi_reduction <add>, %0, %cst [1] : vector<2x64xf32> to vector<2xf32>
    %2 = vector.shape_cast %1 : vector<2xf32> to vector<2x1xf32>
    %cst_1 = arith.constant 6.400000e+01 : f32
    %3 = vector.broadcast %cst_1 : f32 to vector<2x1xf32>
    %4 = arith.divf %2, %3 : vector<2x1xf32>
    %5 = vector.broadcast %4 : vector<2x1xf32> to vector<2x64xf32>
    %6 = arith.subf %0, %5 : vector<2x64xf32>
    %7 = arith.mulf %6, %6 : vector<2x64xf32>
    %cst_2 = arith.constant dense<0.000000e+00> : vector<2xf32>
    %8 = vector.multi_reduction <add>, %7, %cst_2 [1] : vector<2x64xf32> to vector<2xf32>
    %9 = vector.shape_cast %8 : vector<2xf32> to vector<2x1xf32>
    %cst_3 = arith.constant 6.400000e+01 : f32
    %10 = vector.broadcast %cst_3 : f32 to vector<2x1xf32>
    %11 = arith.divf %9, %10 : vector<2x1xf32>
    %cst_4 = arith.constant 9.99999997E-7 : f32
    %12 = vector.broadcast %cst_4 : f32 to vector<2x1xf32>
    %13 = arith.addf %11, %12 : vector<2x1xf32>
    %14 = math.rsqrt %13 : vector<2x1xf32>
    %15 = vector.broadcast %14 : vector<2x1xf32> to vector<2x64xf32>
    %16 = arith.mulf %6, %15 : vector<2x64xf32>
    %c0_5 = arith.constant 0 : index
    %c0_6 = arith.constant 0 : index
    %17 = vector.load %arg2[%c0_5, %c0_6] : memref<1x64xf32, #tpu.memory_space<vmem>>, vector<1x64xf32>
    %18 = vector.broadcast %17 : vector<1x64xf32> to vector<2x64xf32>
    %19 = arith.mulf %16, %18 : vector<2x64xf32>
    %c0_7 = arith.constant 0 : index
    %c0_8 = arith.constant 0 : index
    %20 = vector.load %arg3[%c0_7, %c0_8] : memref<1x64xf32, #tpu.memory_space<vmem>>, vector<1x64xf32>
    %21 = vector.broadcast %20 : vector<1x64xf32> to vector<2x64xf32>
    %22 = arith.addf %19, %21 : vector<2x64xf32>
    %c0_9 = arith.constant 0 : index
    %c0_10 = arith.constant 0 : index
    %23 = vector.load %arg4[%c0_9, %c0_10] : memref<2x64xf32, #tpu.memory_space<vmem>>, vector<2x64xf32>
    tpu.vector_store %arg4[%c0_9, %c0_10], %22 {strides = array<i32>} : memref<2x64xf32, #tpu.memory_space<vmem>>, vector<2x64xf32>,
    return
  }
  func.func @transform_0(%arg0: i32) -> (i32, i32) {
    %c0_i32 = arith.constant 0 : i32
    %c0_i32_0 = arith.constant 0 : i32
    return %arg0, %c0_i32 : i32, i32
  }
  func.func @transform_1(%arg0: i32) -> (i32, i32) {
    %c0_i32 = arith.constant 0 : i32
    %c0_i32_0 = arith.constant 0 : i32
    %c0_i32_1 = arith.constant 0 : i32
    return %c0_i32, %c0_i32_0 : i32, i32
  }
  func.func @transform_2(%arg0: i32) -> (i32, i32) {
    %c0_i32 = arith.constant 0 : i32
    %c0_i32_0 = arith.constant 0 : i32
    %c0_i32_1 = arith.constant 0 : i32
    return %c0_i32, %c0_i32_0 : i32, i32
  }
  func.func @transform_3(%arg0: i32) -> (i32, i32) {
    %c0_i32 = arith.constant 0 : i32
    %c0_i32_0 = arith.constant 0 : i32
    return %arg0, %c0_i32 : i32, i32
  }
}

</mosaic_0001>

<llo_original>
// kernel: vit_forward.15
$region0: #{vit_forward.15}
  #allocation0 [shape = 'u32[]', space=smem, size = 0x4, offset = 0x4, fixed_abs, tag = 'smem constant byte address 0x4 - core index']
  #allocation1 [shape = 'u32[72,128]{1,0:T(1,128)}', space=vmem, size = 0x9000, scoped, tag = 'internal scratch']
  %s0 = inlined_call_operand.vmem [shape: bf16[10,64], index: 0, kind: input, shape index: {}]
  %s1 = inlined_call_operand.vmem [shape: bf16[64,64], index: 1, kind: input, shape index: {}]
  %s2 = inlined_call_operand.vmem [shape: f32[1,64], index: 2, kind: input, shape index: {}]
  %s3 = inlined_call_operand.vmem [shape: f32[10,64], index: 3, kind: input, shape index: {}]
  %s4 = inlined_call_operand.vmem [shape: f32[10,64], index: 4, kind: output, shape index: {}]
  %s5 = sld [smem:[#allocation0]]
  $region26: #{vit_forward.15} parent=0
    _
  %s7 = ssub.s32 1, %s5
  %s8 = scalar_select 0, %s7, %s5
  // Predicated region
  $region2: #{vit_forward.15} parent=0 // pred_check
    _
  $region3: #{vit_forward.15} parent=0 // pred_check_branch
    %10 = sbr.rel (0) target = $region5
  $region4: #{vit_forward.15} parent=0 // pred_region
    _
  $region5: #{vit_forward.15} parent=0 // pred_fallthru
    _
  // Predicated region
  $region6: #{vit_forward.15} parent=0 // pred_check
    _
  $region7: #{vit_forward.15} parent=0 // pred_check_branch
    %12 = sbr.rel (0) target = $region9
  $region8: #{vit_forward.15} parent=0 // pred_region
    _
  $region9: #{vit_forward.15} parent=0 // pred_fallthru
    _
  // Predicated region
  $region10: #{vit_forward.15} parent=0 // pred_check
    _
  $region11: #{vit_forward.15} parent=0 // pred_check_branch
    %14 = sbr.rel (0) target = $region13
  $region12: #{vit_forward.15} parent=0 // pred_region
    _
  $region13: #{vit_forward.15} parent=0 // pred_fallthru
    _
  // Predicated region
  $region14: #{vit_forward.15} parent=0 // pred_check
    _
  $region15: #{vit_forward.15} parent=0 // pred_check_branch
    %16 = sbr.rel (0) target = $region17
  $region16: #{vit_forward.15} parent=0 // pred_region
    _
  $region17: #{vit_forward.15} parent=0 // pred_fallthru
    _
  %v18 = vld [vmem:[%s0] sm:$0xf]
  %v19 = vld [vmem:[%s0 + $0x4] sm:$0x1]
  %v20 = vld [vmem:[%s1] sm:$0xf]
  %v21 = vld [vmem:[%s1 + $0x4] sm:$0xf]
  %v22 = vld [vmem:[%s1 + $0x8] sm:$0xf]
  %v23 = vld [vmem:[%s1 + $0xc] sm:$0xf]
  %v24 = vld [vmem:[%s1 + $0x10] sm:$0xf]
  %v25 = vld [vmem:[%s1 + $0x14] sm:$0xf]
  %v26 = vld [vmem:[%s1 + $0x18] sm:$0xf]
  %v27 = vld [vmem:[%s1 + $0x1c] sm:$0xf]
  %v28 = vld [vmem:[%s2] sm:$0x1]
  %v30 = vperm.slane %v28, 0
  %v34 = vunpack.c.l.b16 %v18
  %v35 = vunpack.c.l.b16 %v19
  %v36 = vpack.c.b16 %v35, %v34
  %v45 = vunpack.c.l.b16 %v20
  %v46 = vunpack.c.l.b16 %v21
  %v47 = vunpack.c.l.b16 %v22
  %v48 = vunpack.c.l.b16 %v23
  %v49 = vunpack.c.l.b16 %v24
  %v50 = vunpack.c.l.b16 %v25
  %v51 = vunpack.c.l.b16 %v26
  %v52 = vunpack.c.l.b16 %v27
  %v53 = vpack.c.b16 %v46, %v45
  %v54 = vpack.c.b16 %v48, %v47
  %v55 = vpack.c.b16 %v50, %v49
  %v56 = vpack.c.b16 %v52, %v51
  %vm61 = vcmask 523264
  %v63 = vsel %vm61, %v36, 0
  %65 = vmatpush.bf16.msra.mxu0 0
  %66 = vmatpush.bf16.msra.mxu0 0
  %67 = vmatpush.bf16.msra.mxu0 0
  %68 = vmatpush.bf16.msra.mxu0 0
  %69 = vmatpush.bf16.msra.mxu0 %v56
  %70 = vmatpush.bf16.msra.mxu0 %v55
  %71 = vmatpush.bf16.msra.mxu0 %v54
  %72 = vmatpush.bf16.msra.mxu0 %v53
  %73 = vmatmul.bf16.gmra.mxu0 %v63
  %v74 = vpop.f32.mrf.mxu0
  %v75 = vadd.f32 %v30, %v74
  %v76 = vpop.f32.mrf.mxu0
  %v77 = vadd.f32 %v30, %v76
  %78 = vdwg.mxu0
  %v79 = vld [vmem:[%s3] sm:$0xff]
  %v80 = vld [vmem:[%s3 + $0x8] sm:$0x3]
  %v81 = vadd.f32 %v75, %v79
  %v82 = vadd.f32 %v77, %v80
  %83 = vst.msk [vmem:[%s4] sm:$0xff] %vm61, %v81
  %vm84 = vcmask 517120
  %85 = vst.msk [vmem:[%s4 + $0x8] sm:$0x3] %vm84, %v82
  // Predicated region
  $region18: #{vit_forward.15} parent=0 // pred_check
    _
  $region19: #{vit_forward.15} parent=0 // pred_check_branch
    %87 = sbr.rel (0) target = $region21
  $region20: #{vit_forward.15} parent=0 // pred_region
    _
  $region21: #{vit_forward.15} parent=0 // pred_fallthru
    _
  // Predicated region
  $region22: #{vit_forward.15} parent=0 // pred_check
    _
  $region23: #{vit_forward.15} parent=0 // pred_check_branch
    %89 = sbr.rel (0) target = $region25
  $region24: #{vit_forward.15} parent=0 // pred_region
    _
  $region25: #{vit_forward.15} parent=0 // pred_fallthru
    _

// kernel: vit_forward.13
$region0: #{vit_forward.13}
  #allocation0 [shape = 'u32[]', space=smem, size = 0x4, offset = 0x4, fixed_abs, tag = 'smem constant byte address 0x4 - core index']
  #allocation1 [shape = 'u32[72,128]{1,0:T(1,128)}', space=vmem, size = 0x9000, scoped, tag = 'internal scratch']
  %s0 = inlined_call_operand.vmem [shape: f32[10,64], index: 0, kind: input, shape index: {}]
  %s1 = inlined_call_operand.vmem [shape: f32[1,64], index: 1, kind: input, shape index: {}]
  %s2 = inlined_call_operand.vmem [shape: f32[1,64], index: 2, kind: input, shape index: {}]
  %s3 = inlined_call_operand.vmem [shape: bf16[64,192], index: 3, kind: input, shape index: {}]
  %s4 = inlined_call_operand.vmem [shape: f32[1,192], index: 4, kind: input, shape index: {}]
  %s5 = inlined_call_operand.vmem [shape: bf16[10,192], index: 5, kind: output, shape index: {}]
  %s6 = sld [smem:[#allocation0]]
  $region30: #{vit_forward.13} parent=0
    _
  %s8 = ssub.s32 1, %s6
  %s9 = scalar_select 0, %s8, %s6
  // Predicated region
  $region2: #{vit_forward.13} parent=0 // pred_check
    _
  $region3: #{vit_forward.13} parent=0 // pred_check_branch
    %11 = sbr.rel (0) target = $region5
  $region4: #{vit_forward.13} parent=0 // pred_region
    _
  $region5: #{vit_forward.13} parent=0 // pred_fallthru
    _
  // Predicated region
  $region6: #{vit_forward.13} parent=0 // pred_check
    _
  $region7: #{vit_forward.13} parent=0 // pred_check_branch
    %13 = sbr.rel (0) target = $region9
  $region8: #{vit_forward.13} parent=0 // pred_region
    _
  $region9: #{vit_forward.13} parent=0 // pred_fallthru
    _
  // Predicated region
  $region10: #{vit_forward.13} parent=0 // pred_check
    _
  $region11: #{vit_forward.13} parent=0 // pred_check_branch
    %15 = sbr.rel (0) target = $region13
  $region12: #{vit_forward.13} parent=0 // pred_region
    _
  $region13: #{vit_forward.13} parent=0 // pred_fallthru
    _
  // Predicated region
  $region14: #{vit_forward.13} parent=0 // pred_check
    _
  $region15: #{vit_forward.13} parent=0 // pred_check_branch
    %17 = sbr.rel (0) target = $region17
  $region16: #{vit_forward.13} parent=0 // pred_region
    _
  $region17: #{vit_forward.13} parent=0 // pred_fallthru
    _
  // Predicated region
  $region18: #{vit_forward.13} parent=0 // pred_check
    _
  $region19: #{vit_forward.13} parent=0 // pred_check_branch
    %19 = sbr.rel (0) target = $region21
  $region20: #{vit_forward.13} parent=0 // pred_region
    _
  $region21: #{vit_forward.13} parent=0 // pred_fallthru
    _
  %v21 = vld [vmem:[%s0] sm:$0xff]
  %v22 = vld [vmem:[%s0 + $0x8] sm:$0x3]
  %vm23 = vcmask 523264
  %v24 = vsel %vm23, %v21, 0.0
  %25 = vadd.xlane.f32.xlu0 %v24
  %v26 = vpop.xlane.xlu0 %25
  %vm27 = vcmask 517120
  %v28 = vsel %vm27, %v22, 0.0
  %29 = vadd.xlane.f32.xlu0 %v28
  %v30 = vpop.xlane.xlu0 %29
  %v31 = vrcp.pop 64.0
  %v32 = vmul.f32 64.0, %v31
  %v33 = vsub.f32 1.0, %v32
  %v34 = vmul.f32 %v31, %v33
  %v35 = vadd.f32 %v31, %v34
  %vm36 = vweird.f32 %v31
  %v37 = vsel %vm36, %v31, %v35
  %v38 = vmul.f32 %v26, %v37
  %v39 = vmul.f32 %v30, %v37
  %v40 = vsub.f32 %v21, %v38
  %v41 = vsub.f32 %v22, %v39
  %v42 = vmul.f32 %v40, %v40
  %v43 = vmul.f32 %v41, %v41
  %v44 = vsel %vm23, %v42, 0.0
  %45 = vadd.xlane.f32.xlu0 %v44
  %v46 = vpop.xlane.xlu0 %45
  %v47 = vsel %vm27, %v43, 0.0
  %48 = vadd.xlane.f32.xlu0 %v47
  %v49 = vpop.xlane.xlu0 %48
  %v50 = vmul.f32 %v46, %v37
  %v51 = vmul.f32 %v49, %v37
  %v52 = vadd.f32 %v50, 1e-06
  %v53 = vadd.f32 %v51, 1e-06
  %v54 = vrsqrt.pop %v52
  %v55 = vmul.f32 %v54, %v52
  %v56 = vmul.f32 %v55, %v54
  %v57 = vmul.f32 0.5, %v56
  %v58 = vsub.f32 1.5, %v57
  %v59 = vmul.f32 %v54, %v58
  %vm60 = vweird.f32 %v52
  %vm61 = vweird.f32 %v54
  %vm62 = vmor %vm60, %vm61
  %v63 = vsel %vm62, %v54, %v59
  %v64 = vrsqrt.pop %v53
  %v65 = vmul.f32 %v64, %v53
  %v66 = vmul.f32 %v65, %v64
  %v67 = vmul.f32 0.5, %v66
  %v68 = vsub.f32 1.5, %v67
  %v69 = vmul.f32 %v64, %v68
  %vm70 = vweird.f32 %v53
  %vm71 = vweird.f32 %v64
  %vm72 = vmor %vm70, %vm71
  %v73 = vsel %vm72, %v64, %v69
  %v74 = vmul.f32 %v40, %v63
  %v75 = vmul.f32 %v41, %v73
  %v76 = vld [vmem:[%s1] sm:$0x1]
  %v78 = vperm.slane %v76, 0
  %v80 = vmul.f32 %v74, %v78
  %v81 = vmul.f32 %v75, %v78
  %v82 = vld [vmem:[%s2] sm:$0x1]
  %v84 = vperm.slane %v82, 0
  %v86 = vadd.f32 %v80, %v84
  %v87 = vadd.f32 %v81, %v84
  %v88 = vpack.c.bf16 %v87, %v86
  %v89 = vld [vmem:[%s3] sm:$0xff]
  %v90 = vld [vmem:[%s3 + $0x8] sm:$0xff]
  %v91 = vld [vmem:[%s3 + $0x10] sm:$0xff]
  %v92 = vld [vmem:[%s3 + $0x18] sm:$0xff]
  %v93 = vld [vmem:[%s3 + $0x20] sm:$0xff]
  %v94 = vld [vmem:[%s3 + $0x28] sm:$0xff]
  %v95 = vld [vmem:[%s3 + $0x30] sm:$0xff]
  %v96 = vld [vmem:[%s3 + $0x38] sm:$0xff]
  %v97 = vld [vmem:[%s4] sm:$0x3]
  %v99 = vperm.slane %v97, 0
  %v100 = vperm.slane %v97, 1
  %v111 = vunpack.c.l.b16 %v89
  %v112 = vunpack.c.h.b16 %v89
  %v113 = vunpack.c.l.b16 %v90
  %v114 = vunpack.c.h.b16 %v90
  %v115 = vunpack.c.l.b16 %v91
  %v116 = vunpack.c.h.b16 %v91
  %v117 = vunpack.c.l.b16 %v92
  %v118 = vunpack.c.h.b16 %v92
  %v119 = vunpack.c.l.b16 %v93
  %v120 = vunpack.c.h.b16 %v93
  %v121 = vunpack.c.l.b16 %v94
  %v122 = vunpack.c.h.b16 %v94
  %v123 = vunpack.c.l.b16 %v95
  %v124 = vunpack.c.h.b16 %v95
  %v125 = vunpack.c.l.b16 %v96
  %v126 = vunpack.c.h.b16 %v96
  %v127 = vpack.c.b16 %v113, %v111
  %v128 = vpack.c.b16 %v114, %v112
  %v129 = vpack.c.b16 %v117, %v115
  %v130 = vpack.c.b16 %v118, %v116
  %v131 = vpack.c.b16 %v121, %v119
  %v132 = vpack.c.b16 %v122, %v120
  %v133 = vpack.c.b16 %v125, %v123
  %v134 = vpack.c.b16 %v126, %v124
  %v144 = vsel %vm23, %v88, 0
  %146 = vmatpush.bf16.msra.mxu0 0
  %147 = vmatpush.bf16.msra.mxu0 0
  %148 = vmatpush.bf16.msra.mxu0 0
  %149 = vmatpush.bf16.msra.mxu0 0
  %150 = vmatpush.bf16.msra.mxu0 %v133
  %151 = vmatpush.bf16.msra.mxu0 %v131
  %152 = vmatpush.bf16.msra.mxu0 %v129
  %153 = vmatpush.bf16.msra.mxu0 %v127
  %154 = vmatmul.bf16.gmra.mxu0 %v144
  %v155 = vpop.f32.mrf.mxu0
  %v156 = vadd.f32 %v99, %v155
  %v157 = vpop.f32.mrf.mxu0
  %v158 = vadd.f32 %v99, %v157
  %159 = vdwg.mxu0
  %160 = vmatpush.bf16.msra.mxu0 0
  %161 = vmatpush.bf16.msra.mxu0 0
  %162 = vmatpush.bf16.msra.mxu0 0
  %163 = vmatpush.bf16.msra.mxu0 0
  %164 = vmatpush.bf16.msra.mxu0 %v134
  %165 = vmatpush.bf16.msra.mxu0 %v132
  %166 = vmatpush.bf16.msra.mxu0 %v130
  %167 = vmatpush.bf16.msra.mxu0 %v128
  %168 = vmatmul.bf16.gmra.mxu0 %v144
  %v169 = vpop.f32.mrf.mxu0
  %v170 = vadd.f32 %v100, %v169
  %v171 = vpop.f32.mrf.mxu0
  %v172 = vadd.f32 %v100, %v171
  %173 = vdwg.mxu0
  %v174 = vpack.c.bf16 %v170, %v156
  %v175 = vpack.c.bf16 %v172, %v158
  %vm176 = vcmask 1043456
  %vm177 = vcmask 523268
  %vm178 = vmor %vm177, %vm176
  %179 = vst.msk [vmem:[%s5] sm:$0xff] %vm178, %v174
  %vm180 = vcmask 1040384
  %vm181 = vcmask 520196
  %vm182 = vmor %vm181, %vm180
  %183 = vst.msk [vmem:[%s5 + $0x8] sm:$0x11] %vm182, %v175
  // Predicated region
  $region22: #{vit_forward.13} parent=0 // pred_check
    _
  $region23: #{vit_forward.13} parent=0 // pred_check_branch
    %185 = sbr.rel (0) target = $region25
  $region24: #{vit_forward.13} parent=0 // pred_region
    _
  $region25: #{vit_forward.13} parent=0 // pred_fallthru
    _
  // Predicated region
  $region26: #{vit_forward.13} parent=0 // pred_check
    _
  $region27: #{vit_forward.13} parent=0 // pred_check_branch
    %187 = sbr.rel (0) target = $region29
  $region28: #{vit_forward.13} parent=0 // pred_region
    _
  $region29: #{vit_forward.13} parent=0 // pred_fallthru
    _

// kernel: vit_forward.14
$region0: #{vit_forward.14}
  #allocation0 [shape = 'u32[]', space=smem, size = 0x4, offset = 0x4, fixed_abs, tag = 'smem constant byte address 0x4 - core index']
  #allocation1 [shape = 'u32[72,128]{1,0:T(1,128)}', space=vmem, size = 0x9000, scoped, tag = 'internal scratch']
  %s0 = inlined_call_operand.vmem [shape: bf16[2,5,192], index: 0, kind: input, shape index: {}]
  %s1 = inlined_call_operand.vmem [shape: bf16[2,5,64], index: 1, kind: output, shape index: {}]
  %s2 = sld [smem:[#allocation0]]
  $region37: #{vit_forward.14} parent=0
    _
  %s4 = ssub.s32 1, %s2
  %s5 = scalar_select 0, %s4, %s2
  loop: start=0, step=1, limit=4
  $region2: #{vit_forward.14} parent=0 // loop_pre_header
    _
  $region3: #{vit_forward.14} parent=0 // loop_header
    %s7 = sphi 0, %s11
    %p8 = scmp.ge.s32.totalorder %s7, 4
    %s14 = sphi 0, %s26
    %s15 = sphi 0, %s22
    %s16 = sphi 0, %s14
    %s17 = sphi 0, %s15
    %s18 = sphi 0, %s16
    %s19 = sphi 0, %s17
    %s29 = sphi 0, %s31
    %s32 = sphi 0, %s29
    %s33 = sphi 0, %s32
    %s49 = sphi 0, %s33
    %s57 = sphi 0, %s59
    %s60 = sphi 0, %s57
    %s61 = sphi 0, %s60
    %s77 = sphi 0, %s61
  $region4: #{vit_forward.14} parent=0 // loop_header_branch
    %10 = sbr.rel (%p8) target = $region8
  $region5: #{vit_forward.14} parent=0 // loop_body
    %s12 = ssub.s32 %s7, 1
    %s13 = ssub.s32 %s7, 2
    %s20 = sadd.s32 1, %s15
    %p21 = scmp.ge.s32.totalorder %s20, 1
    %s22 = scalar_select %p21, 0, %s20
    %s23 = sadd.s32 1, %s14
    %s24 = scalar_select %p21, %s23, %s14
    %p25 = scmp.ge.s32.totalorder %s24, 2
    %s26 = scalar_select %p25, 0, %s24
    %s27 = ssub.s32 %s14, %s26
    %p28 = scmp.eq.s32.totalorder %s27, 0
    %s30 = sadd.s32 %s29, 1
    %s31 = scalar_select %p28, %s29, %s30
    %p34 = pneg %p28
    %p35 = scmp.eq.s32.totalorder %s7, 1
    %p36 = por %p34, %p35
    %p37 = scmp.ne.s32.totalorder %s29, %s32
    %p38 = scmp.eq.s32.totalorder %s7, 0
    %p39 = por %p37, %p38
    %p40 = scmp.ne.s32.totalorder %s29, %s32
    %p41 = scmp.eq.s32.totalorder %s12, 1
    %p42 = por %p40, %p41
    %p43 = scmp.ne.s32.totalorder %s32, %s33
    %p44 = scmp.eq.s32.totalorder %s12, 0
    %p45 = por %p43, %p44
    %p46 = scmp.ne.s32.totalorder %s32, %s33
    %p47 = scmp.eq.s32.totalorder %s13, 1
    %p48 = por %p46, %p47
    %p50 = scmp.ne.s32.totalorder %s33, %s49
    %p51 = scmp.eq.s32.totalorder %s13, 0
    %p52 = por %p50, %p51
    %s53 = ssub.s32 %s14, %s26
    %s54 = ssub.s32 %s15, %s22
    %s55 = sor.u32 %s53, %s54
    %p56 = scmp.eq.s32.totalorder %s55, 0
    %s58 = sadd.s32 %s57, 1
    %s59 = scalar_select %p56, %s57, %s58
    %p62 = pneg %p56
    %p63 = scmp.eq.s32.totalorder %s7, 1
    %p64 = por %p62, %p63
    %p65 = scmp.ne.s32.totalorder %s57, %s60
    %p66 = scmp.eq.s32.totalorder %s7, 0
    %p67 = por %p65, %p66
    %p68 = scmp.ne.s32.totalorder %s57, %s60
    %p69 = scmp.eq.s32.totalorder %s12, 1
    %p70 = por %p68, %p69
    %p71 = scmp.ne.s32.totalorder %s60, %s61
    %p72 = scmp.eq.s32.totalorder %s12, 0
    %p73 = por %p71, %p72
    %p74 = scmp.ne.s32.totalorder %s60, %s61
    %p75 = scmp.eq.s32.totalorder %s13, 1
    %p76 = por %p74, %p75
    %p78 = scmp.ne.s32.totalorder %s61, %s77
    %p79 = scmp.eq.s32.totalorder %s13, 0
    %p80 = por %p78, %p79
    %p81 = scmp.le.s32.totalorder 1, %s7
    %p82 = scmp.lt.s32.totalorder %s7, 3
    %p83 = pnand %p81, %p82
    %p84 = pneg %p83
    // Predicated region
    $region9: #{vit_forward.14} parent=5 // pred_check
      _
    $region10: #{vit_forward.14} parent=5 // pred_check_branch
      %86 = sbr.rel (%p83) target = $region12
    $region11: #{vit_forward.14} parent=5 // pred_region
      %s87 = ssub.s32 %s7, 1
    $region12: #{vit_forward.14} parent=5 // pred_fallthru
      _
    %p88 = scmp.lt.s32.totalorder %s7, 2
    // Predicated region
    $region13: #{vit_forward.14} parent=5 // pred_check
      %p89 = pneg %p88
    $region14: #{vit_forward.14} parent=5 // pred_check_branch
      %91 = sbr.rel (%p89) target = $region16
    $region15: #{vit_forward.14} parent=5 // pred_region
      // Predicated region
      $region17: #{vit_forward.14} parent=15 // pred_check
        %p92 = pneg %p39
      $region18: #{vit_forward.14} parent=15 // pred_check_branch
        %94 = sbr.rel (%p92) target = $region20
      $region19: #{vit_forward.14} parent=15 // pred_region
        %p95 = scmp.lt.s32.totalorder %s14, 1
        %s96 = scalar_select %p95, %s14, 1
        %s97 = smul.addr %s96, 2
        %s98 = smul.addr %s97, 4
        %s99 = scalar_lea.vmem %s0, %s98
      $region20: #{vit_forward.14} parent=15 // pred_fallthru
        _
    $region16: #{vit_forward.14} parent=5 // pred_fallthru
      _
    %p100 = scmp.le.s32.totalorder 1, %s7
    %p101 = scmp.lt.s32.totalorder %s7, 3
    %p102 = pnand %p100, %p101
    %p103 = pneg %p102
    // Predicated region
    $region21: #{vit_forward.14} parent=5 // pred_check
      _
    $region22: #{vit_forward.14} parent=5 // pred_check_branch
      %105 = sbr.rel (%p102) target = $region24
    $region23: #{vit_forward.14} parent=5 // pred_region
      %s106 = ssub.s32 %s7, 1
      %p107 = scmp.lt.s32.totalorder %s16, 1
      %s108 = scalar_select %p107, %s16, 1
      %s109 = smul.addr %s108, 2
      %s110 = smul.addr %s109, 4
      %s111 = scalar_lea.vmem %s0, %s110
      %p112 = pneg %p45
      %p113 = pneg %p42
      %p114 = pneg %p73
      %p115 = pneg %p70
      %p116 = scmp.lt.s32.totalorder %s16, 1
      %s117 = scalar_select %p116, %s16, 1
      %p118 = scmp.lt.s32.totalorder %s17, 0
      %s119 = scalar_select %p118, %s17, 0
      %s120 = sadd.s32 %s119, %s117
      %s121 = smul.addr %s120, 4
      %s122 = scalar_lea.vmem %s1, %s121
      %p123 = scmp.lt.s32.totalorder %s16, 1
      %s124 = scalar_select %p123, %s16, 1
      %s125 = smul.addr %s124, 2
      %s126 = smul.addr %s125, 4
      %s127 = scalar_lea.vmem %s0, %s126
      %p128 = scmp.lt.s32.totalorder %s16, 1
      %s129 = scalar_select %p128, %s16, 1
      %p130 = scmp.lt.s32.totalorder %s17, 0
      %s131 = scalar_select %p130, %s17, 0
      %s132 = sadd.s32 %s131, %s129
      %s133 = smul.addr %s132, 4
      %s134 = scalar_lea.vmem %s1, %s133
      %v136 = vld [vmem:[%s127] sm:$0x7]
      %v137 = vld [vmem:[%s127 + $0x4] sm:$0x7]
      %v139 = vunpack.c.l.b16 %v136
      %v140 = vpack.c.b16 %v139, %v139
      %141 = vrot.lane.b32.xlu0 %v140, 64
      %v142 = vpop.permute.xlu0 %141
      %vm143 = vcmask 130048
      %v145 = vsel %vm143, %v136, 0
      %v148 = vsel %vm143, %v142, 0
      %150 = vmatpush.bf16.xpose.msra.mxu0 0
      %151 = vmatpush.bf16.xpose.msra.mxu0 0
      %152 = vmatpush.bf16.xpose.msra.mxu0 0
      %153 = vmatpush.bf16.xpose.msra.mxu0 0
      %154 = vmatpush.bf16.xpose.msra.mxu0 0
      %155 = vmatpush.bf16.xpose.msra.mxu0 0
      %156 = vmatpush.bf16.xpose.msra.mxu0 0
      %157 = vmatpush.bf16.xpose.msra.mxu0 %v148
      %158 = vmatmul.bf16.gmra.mxu0 %v145
      %v159 = vpop.f32.mrf.mxu0
      %v160 = vadd.f32 0.0, %v159
      %v161 = vpop.f32.mrf.mxu0
      %162 = vdwg.mxu0
      %v163 = vmul.f32 %v160, 0.25
      %vm164 = vcmask 36864
      %v165 = vsel %vm164, %v163, -inf
      %166 = vmax.xlane.f32.xlu0 %v165
      %v167 = vpop.xlane.xlu0 %166
      %v168 = vsub.f32 %v163, %v167
      %v169 = vmul.f32 %v168, 1.442695
      %v170 = vpow.pop %v169
      %v171 = vsel %vm164, %v170, 0.0
      %172 = vadd.xlane.f32.xlu0 %v171
      %v173 = vpop.xlane.xlu0 %172
      %v174 = vrcp.pop %v173
      %v175 = vmul.f32 %v170, %v174
      %v176 = vpack.c.bf16 %v175, %v175
      %vm177 = vcmask 39936
      %v179 = vsel %vm177, %v176, 0
      %vm181 = vcmask 1041408
      %vm182 = vcmask 1042432
      %v183 = vsel %vm181, 4294967295, 65535
      %v184 = vsel %vm182, %v183, 0
      %v186 = vand.u32 %v137, %v184
      %188 = vmatpush.bf16.msra.mxu0 0
      %189 = vmatpush.bf16.msra.mxu0 0
      %190 = vmatpush.bf16.msra.mxu0 0
      %191 = vmatpush.bf16.msra.mxu0 0
      %192 = vmatpush.bf16.msra.mxu0 0
      %193 = vmatpush.bf16.msra.mxu0 0
      %194 = vmatpush.bf16.msra.mxu0 0
      %195 = vmatpush.bf16.msra.mxu0 %v186
      %196 = vmatmul.bf16.gmra.mxu0 %v179
      %v197 = vpop.f32.mrf.mxu0
      %v198 = vadd.f32 0.0, %v197
      %v199 = vpop.f32.mrf.mxu0
      %200 = vdwg.mxu0
      %v201 = vpack.c.bf16 %v198, %v198
      %202 = vrot.lane.b32.xlu0 %v140, 112
      %v203 = vpop.permute.xlu0 %202
      %204 = vrot.lane.b32.xlu0 %v140, 48
      %v205 = vpop.permute.xlu0 %204
      %v207 = vsel %vm143, %v203, 0
      %v210 = vsel %vm143, %v205, 0
      %212 = vmatpush.bf16.xpose.msra.mxu0 0
      %213 = vmatpush.bf16.xpose.msra.mxu0 0
      %214 = vmatpush.bf16.xpose.msra.mxu0 0
      %215 = vmatpush.bf16.xpose.msra.mxu0 0
      %216 = vmatpush.bf16.xpose.msra.mxu0 0
      %217 = vmatpush.bf16.xpose.msra.mxu0 0
      %218 = vmatpush.bf16.xpose.msra.mxu0 0
      %219 = vmatpush.bf16.xpose.msra.mxu0 %v210
      %220 = vmatmul.bf16.gmra.mxu0 %v207
      %v221 = vpop.f32.mrf.mxu0
      %v222 = vadd.f32 0.0, %v221
      %v223 = vpop.f32.mrf.mxu0
      %224 = vdwg.mxu0
      %v225 = vmul.f32 %v222, 0.25
      %v226 = vsel %vm164, %v225, -inf
      %227 = vmax.xlane.f32.xlu0 %v226
      %v228 = vpop.xlane.xlu0 %227
      %v229 = vsub.f32 %v225, %v228
      %v230 = vmul.f32 %v229, 1.442695
      %v231 = vpow.pop %v230
      %v232 = vsel %vm164, %v231, 0.0
      %233 = vadd.xlane.f32.xlu0 %v232
      %v234 = vpop.xlane.xlu0 %233
      %v235 = vrcp.pop %v234
      %v236 = vmul.f32 %v231, %v235
      %v237 = vpack.c.bf16 %v236, %v236
      %v239 = vunpack.c.l.b16 %v137
      %v240 = vpack.c.b16 %v239, %v239
      %241 = vrot.lane.b32.xlu0 %v240, 112
      %v242 = vpop.permute.xlu0 %241
      %v244 = vsel %vm177, %v237, 0
      %v247 = vand.u32 %v242, %v184
      %249 = vmatpush.bf16.msra.mxu0 0
      %250 = vmatpush.bf16.msra.mxu0 0
      %251 = vmatpush.bf16.msra.mxu0 0
      %252 = vmatpush.bf16.msra.mxu0 0
      %253 = vmatpush.bf16.msra.mxu0 0
      %254 = vmatpush.bf16.msra.mxu0 0
      %255 = vmatpush.bf16.msra.mxu0 0
      %256 = vmatpush.bf16.msra.mxu0 %v247
      %257 = vmatmul.bf16.gmra.mxu0 %v244
      %v258 = vpop.f32.mrf.mxu0
      %v259 = vadd.f32 0.0, %v258
      %v260 = vpop.f32.mrf.mxu0
      %261 = vdwg.mxu0
      %v262 = vpack.c.bf16 %v259, %v259
      %263 = vrot.lane.b32.xlu0 %v140, 96
      %v264 = vpop.permute.xlu0 %263
      %265 = vrot.lane.b32.xlu0 %v140, 32
      %v266 = vpop.permute.xlu0 %265
      %v268 = vsel %vm143, %v264, 0
      %v271 = vsel %vm143, %v266, 0
      %273 = vmatpush.bf16.xpose.msra.mxu0 0
      %274 = vmatpush.bf16.xpose.msra.mxu0 0
      %275 = vmatpush.bf16.xpose.msra.mxu0 0
      %276 = vmatpush.bf16.xpose.msra.mxu0 0
      %277 = vmatpush.bf16.xpose.msra.mxu0 0
      %278 = vmatpush.bf16.xpose.msra.mxu0 0
      %279 = vmatpush.bf16.xpose.msra.mxu0 0
      %280 = vmatpush.bf16.xpose.msra.mxu0 %v271
      %281 = vmatmul.bf16.gmra.mxu0 %v268
      %v282 = vpop.f32.mrf.mxu0
      %v283 = vadd.f32 0.0, %v282
      %v284 = vpop.f32.mrf.mxu0
      %285 = vdwg.mxu0
      %v286 = vmul.f32 %v283, 0.25
      %v287 = vsel %vm164, %v286, -inf
      %288 = vmax.xlane.f32.xlu0 %v287
      %v289 = vpop.xlane.xlu0 %288
      %v290 = vsub.f32 %v286, %v289
      %v291 = vmul.f32 %v290, 1.442695
      %v292 = vpow.pop %v291
      %v293 = vsel %vm164, %v292, 0.0
      %294 = vadd.xlane.f32.xlu0 %v293
      %v295 = vpop.xlane.xlu0 %294
      %v296 = vrcp.pop %v295
      %v297 = vmul.f32 %v292, %v296
      %v298 = vpack.c.bf16 %v297, %v297
      %299 = vrot.lane.b32.xlu0 %v240, 96
      %v300 = vpop.permute.xlu0 %299
      %v302 = vsel %vm177, %v298, 0
      %v305 = vand.u32 %v300, %v184
      %307 = vmatpush.bf16.msra.mxu0 0
      %308 = vmatpush.bf16.msra.mxu0 0
      %309 = vmatpush.bf16.msra.mxu0 0
      %310 = vmatpush.bf16.msra.mxu0 0
      %311 = vmatpush.bf16.msra.mxu0 0
      %312 = vmatpush.bf16.msra.mxu0 0
      %313 = vmatpush.bf16.msra.mxu0 0
      %314 = vmatpush.bf16.msra.mxu0 %v305
      %315 = vmatmul.bf16.gmra.mxu0 %v302
      %v316 = vpop.f32.mrf.mxu0
      %v317 = vadd.f32 0.0, %v316
      %v318 = vpop.f32.mrf.mxu0
      %319 = vdwg.mxu0
      %v320 = vpack.c.bf16 %v317, %v317
      %321 = vrot.lane.b32.xlu0 %v140, 80
      %v322 = vpop.permute.xlu0 %321
      %323 = vrot.lane.b32.xlu0 %v140, 16
      %v324 = vpop.permute.xlu0 %323
      %v326 = vsel %vm143, %v322, 0
      %v329 = vsel %vm143, %v324, 0
      %331 = vmatpush.bf16.xpose.msra.mxu0 0
      %332 = vmatpush.bf16.xpose.msra.mxu0 0
      %333 = vmatpush.bf16.xpose.msra.mxu0 0
      %334 = vmatpush.bf16.xpose.msra.mxu0 0
      %335 = vmatpush.bf16.xpose.msra.mxu0 0
      %336 = vmatpush.bf16.xpose.msra.mxu0 0
      %337 = vmatpush.bf16.xpose.msra.mxu0 0
      %338 = vmatpush.bf16.xpose.msra.mxu0 %v329
      %339 = vmatmul.bf16.gmra.mxu0 %v326
      %v340 = vpop.f32.mrf.mxu0
      %v341 = vadd.f32 0.0, %v340
      %v342 = vpop.f32.mrf.mxu0
      %343 = vdwg.mxu0
      %v344 = vmul.f32 %v341, 0.25
      %v345 = vsel %vm164, %v344, -inf
      %346 = vmax.xlane.f32.xlu0 %v345
      %v347 = vpop.xlane.xlu0 %346
      %v348 = vsub.f32 %v344, %v347
      %v349 = vmul.f32 %v348, 1.442695
      %v350 = vpow.pop %v349
      %v351 = vsel %vm164, %v350, 0.0
      %352 = vadd.xlane.f32.xlu0 %v351
      %v353 = vpop.xlane.xlu0 %352
      %v354 = vrcp.pop %v353
      %v355 = vmul.f32 %v350, %v354
      %v356 = vpack.c.bf16 %v355, %v355
      %357 = vrot.lane.b32.xlu0 %v240, 80
      %v358 = vpop.permute.xlu0 %357
      %v360 = vsel %vm177, %v356, 0
      %v363 = vand.u32 %v358, %v184
      %365 = vmatpush.bf16.msra.mxu0 0
      %366 = vmatpush.bf16.msra.mxu0 0
      %367 = vmatpush.bf16.msra.mxu0 0
      %368 = vmatpush.bf16.msra.mxu0 0
      %369 = vmatpush.bf16.msra.mxu0 0
      %370 = vmatpush.bf16.msra.mxu0 0
      %371 = vmatpush.bf16.msra.mxu0 0
      %372 = vmatpush.bf16.msra.mxu0 %v363
      %373 = vmatmul.bf16.gmra.mxu0 %v360
      %v374 = vpop.f32.mrf.mxu0
      %v375 = vadd.f32 0.0, %v374
      %v376 = vpop.f32.mrf.mxu0
      %377 = vdwg.mxu0
      %v378 = vpack.c.bf16 %v375, %v375
      %v380 = vunpack.c.l.b16 %v262
      %v381 = vpack.c.b16 %v380, %v380
      %382 = vrot.lane.b32.xlu0 %v381, 16
      %v383 = vpop.permute.xlu0 %382
      %v385 = vunpack.c.l.b16 %v320
      %v386 = vpack.c.b16 %v385, %v385
      %387 = vrot.lane.b32.xlu0 %v386, 32
      %v388 = vpop.permute.xlu0 %387
      %v390 = vunpack.c.l.b16 %v378
      %v391 = vpack.c.b16 %v390, %v390
      %392 = vrot.lane.b32.xlu0 %v391, 48
      %v393 = vpop.permute.xlu0 %392
      %v396 = vsel %vm143, %v201, %v383
      %vm397 = vcmask 261120
      %v399 = vsel %vm397, %v396, %v388
      %vm400 = vcmask 392192
      %v402 = vsel %vm400, %v399, %v393
      %vm404 = vcmask 518144
      %vm405 = vsmask.f32 2304
      %vm406 = vmand %vm404, %vm405
      %v407 = vld [vmem:[%s134] sm:$0x7]
      %v408 = vsel %vm406, %v402, %v407
      %409 = vst [vmem:[%s134] sm:$0x7] %v408
      %p410 = scmp.lt.s32.totalorder %s16, 1
      %s411 = scalar_select %p410, %s16, 1
      %p412 = scmp.lt.s32.totalorder %s17, 0
      %s413 = scalar_select %p412, %s17, 0
      %s414 = sadd.s32 %s413, %s411
      %s415 = smul.addr %s414, 4
      %s416 = scalar_lea.vmem %s1, %s415
      // Predicated region
      $region25: #{vit_forward.14} parent=23 // pred_check
        %p417 = pneg %p70
      $region26: #{vit_forward.14} parent=23 // pred_check_branch
        %419 = sbr.rel (%p417) target = $region28
      $region27: #{vit_forward.14} parent=23 // pred_region
        _
      $region28: #{vit_forward.14} parent=23 // pred_fallthru
        _
    $region24: #{vit_forward.14} parent=5 // pred_fallthru
      _
    %p420 = scmp.le.s32.totalorder 2, %s7
    // Predicated region
    $region29: #{vit_forward.14} parent=5 // pred_check
      %p421 = pneg %p420
    $region30: #{vit_forward.14} parent=5 // pred_check_branch
      %423 = sbr.rel (%p421) target = $region32
    $region31: #{vit_forward.14} parent=5 // pred_region
      %s424 = ssub.s32 %s7, 2
      // Predicated region
      $region33: #{vit_forward.14} parent=31 // pred_check
        %p425 = pneg %p76
      $region34: #{vit_forward.14} parent=31 // pred_check_branch
        %427 = sbr.rel (%p425) target = $region36
      $region35: #{vit_forward.14} parent=31 // pred_region
        %p428 = scmp.lt.s32.totalorder %s18, 1
        %s429 = scalar_select %p428, %s18, 1
        %p430 = scmp.lt.s32.totalorder %s19, 0
        %s431 = scalar_select %p430, %s19, 0
        %s432 = sadd.s32 %s431, %s429
        %s433 = smul.addr %s432, 4
        %s434 = scalar_lea.vmem %s1, %s433
      $region36: #{vit_forward.14} parent=31 // pred_fallthru
        _
    $region32: #{vit_forward.14} parent=5 // pred_fallthru
      _
  $region6: #{vit_forward.14} parent=0 // loop_footer
    %s11 = sadd.s32 1, %s7
  $region7: #{vit_forward.14} parent=0 // loop_footer_branch
    %6 = sbr.rel target = $region3
  $region8: #{vit_forward.14} parent=0 // loop_exit
    _

// kernel: vit_forward.12
$region0: #{vit_forward.12}
  #allocation0 [shape = 'u32[]', space=smem, size = 0x4, offset = 0x4, fixed_abs, tag = 'smem constant byte address 0x4 - core index']
  #allocation1 [shape = 'u32[72,128]{1,0:T(1,128)}', space=vmem, size = 0x9000, scoped, tag = 'internal scratch']
  %s0 = inlined_call_operand.vmem [shape: bf16[8,768], index: 0, kind: input, shape index: {}]
  %s1 = inlined_call_operand.vmem [shape: bf16[768,64], index: 1, kind: input, shape index: {}]
  %s2 = inlined_call_operand.vmem [shape: f32[1,64], index: 2, kind: input, shape index: {}]
  %s3 = inlined_call_operand.vmem [shape: bf16[8,64], index: 3, kind: output, shape index: {}]
  %s4 = sld [smem:[#allocation0]]
  $region22: #{vit_forward.12} parent=0
    _
  %s6 = ssub.s32 1, %s4
  %s7 = scalar_select 0, %s6, %s4
  // Predicated region
  $region2: #{vit_forward.12} parent=0 // pred_check
    _
  $region3: #{vit_forward.12} parent=0 // pred_check_branch
    %9 = sbr.rel (0) target = $region5
  $region4: #{vit_forward.12} parent=0 // pred_region
    _
  $region5: #{vit_forward.12} parent=0 // pred_fallthru
    _
  // Predicated region
  $region6: #{vit_forward.12} parent=0 // pred_check
    _
  $region7: #{vit_forward.12} parent=0 // pred_check_branch
    %11 = sbr.rel (0) target = $region9
  $region8: #{vit_forward.12} parent=0 // pred_region
    _
  $region9: #{vit_forward.12} parent=0 // pred_fallthru
    _
  // Predicated region
  $region10: #{vit_forward.12} parent=0 // pred_check
    _
  $region11: #{vit_forward.12} parent=0 // pred_check_branch
    %13 = sbr.rel (0) target = $region13
  $region12: #{vit_forward.12} parent=0 // pred_region
    _
  $region13: #{vit_forward.12} parent=0 // pred_fallthru
    _
  %v14 = vld [vmem:[%s0] sm:$0xff]
  %v15 = vld [vmem:[%s0 + $0x8] sm:$0xff]
  %v16 = vld [vmem:[%s0 + $0x10] sm:$0xff]
  %v17 = vld [vmem:[%s1] sm:$0xf]
  %v18 = vld [vmem:[%s1 + $0x4] sm:$0xf]
  %v19 = vld [vmem:[%s1 + $0x8] sm:$0xf]
  %v20 = vld [vmem:[%s1 + $0xc] sm:$0xf]
  %v21 = vld [vmem:[%s1 + $0x10] sm:$0xf]
  %v22 = vld [vmem:[%s1 + $0x14] sm:$0xf]
  %v23 = vld [vmem:[%s1 + $0x18] sm:$0xf]
  %v24 = vld [vmem:[%s1 + $0x1c] sm:$0xf]
  %v25 = vld [vmem:[%s1 + $0x20] sm:$0xf]
  %v26 = vld [vmem:[%s1 + $0x24] sm:$0xf]
  %v27 = vld [vmem:[%s1 + $0x28] sm:$0xf]
  %v28 = vld [vmem:[%s1 + $0x2c] sm:$0xf]
  %v29 = vld [vmem:[%s1 + $0x30] sm:$0xf]
  %v30 = vld [vmem:[%s1 + $0x34] sm:$0xf]
  %v31 = vld [vmem:[%s1 + $0x38] sm:$0xf]
  %v32 = vld [vmem:[%s1 + $0x3c] sm:$0xf]
  %v33 = vld [vmem:[%s1 + $0x40] sm:$0xf]
  %v34 = vld [vmem:[%s1 + $0x44] sm:$0xf]
  %v35 = vld [vmem:[%s1 + $0x48] sm:$0xf]
  %v36 = vld [vmem:[%s1 + $0x4c] sm:$0xf]
  %v37 = vld [vmem:[%s1 + $0x50] sm:$0xf]
  %v38 = vld [vmem:[%s1 + $0x54] sm:$0xf]
  %v39 = vld [vmem:[%s1 + $0x58] sm:$0xf]
  %v40 = vld [vmem:[%s1 + $0x5c] sm:$0xf]
  %v41 = vld [vmem:[%s1 + $0x60] sm:$0xf]
  %v42 = vld [vmem:[%s1 + $0x64] sm:$0xf]
  %v43 = vld [vmem:[%s1 + $0x68] sm:$0xf]
  %v44 = vld [vmem:[%s1 + $0x6c] sm:$0xf]
  %v45 = vld [vmem:[%s1 + $0x70] sm:$0xf]
  %v46 = vld [vmem:[%s1 + $0x74] sm:$0xf]
  %v47 = vld [vmem:[%s1 + $0x78] sm:$0xf]
  %v48 = vld [vmem:[%s1 + $0x7c] sm:$0xf]
  %v49 = vld [vmem:[%s1 + $0x80] sm:$0xf]
  %v50 = vld [vmem:[%s1 + $0x84] sm:$0xf]
  %v51 = vld [vmem:[%s1 + $0x88] sm:$0xf]
  %v52 = vld [vmem:[%s1 + $0x8c] sm:$0xf]
  %v53 = vld [vmem:[%s1 + $0x90] sm:$0xf]
  %v54 = vld [vmem:[%s1 + $0x94] sm:$0xf]
  %v55 = vld [vmem:[%s1 + $0x98] sm:$0xf]
  %v56 = vld [vmem:[%s1 + $0x9c] sm:$0xf]
  %v57 = vld [vmem:[%s1 + $0xa0] sm:$0xf]
  %v58 = vld [vmem:[%s1 + $0xa4] sm:$0xf]
  %v59 = vld [vmem:[%s1 + $0xa8] sm:$0xf]
  %v60 = vld [vmem:[%s1 + $0xac] sm:$0xf]
  %v61 = vld [vmem:[%s1 + $0xb0] sm:$0xf]
  %v62 = vld [vmem:[%s1 + $0xb4] sm:$0xf]
  %v63 = vld [vmem:[%s1 + $0xb8] sm:$0xf]
  %v64 = vld [vmem:[%s1 + $0xbc] sm:$0xf]
  %v65 = vld [vmem:[%s1 + $0xc0] sm:$0xf]
  %v66 = vld [vmem:[%s1 + $0xc4] sm:$0xf]
  %v67 = vld [vmem:[%s1 + $0xc8] sm:$0xf]
  %v68 = vld [vmem:[%s1 + $0xcc] sm:$0xf]
  %v69 = vld [vmem:[%s1 + $0xd0] sm:$0xf]
  %v70 = vld [vmem:[%s1 + $0xd4] sm:$0xf]
  %v71 = vld [vmem:[%s1 + $0xd8] sm:$0xf]
  %v72 = vld [vmem:[%s1 + $0xdc] sm:$0xf]
  %v73 = vld [vmem:[%s1 + $0xe0] sm:$0xf]
  %v74 = vld [vmem:[%s1 + $0xe4] sm:$0xf]
  %v75 = vld [vmem:[%s1 + $0xe8] sm:$0xf]
  %v76 = vld [vmem:[%s1 + $0xec] sm:$0xf]
  %v77 = vld [vmem:[%s1 + $0xf0] sm:$0xf]
  %v78 = vld [vmem:[%s1 + $0xf4] sm:$0xf]
  %v79 = vld [vmem:[%s1 + $0xf8] sm:$0xf]
  %v80 = vld [vmem:[%s1 + $0xfc] sm:$0xf]
  %v81 = vld [vmem:[%s1 + $0x100] sm:$0xf]
  %v82 = vld [vmem:[%s1 + $0x104] sm:$0xf]
  %v83 = vld [vmem:[%s1 + $0x108] sm:$0xf]
  %v84 = vld [vmem:[%s1 + $0x10c] sm:$0xf]
  %v85 = vld [vmem:[%s1 + $0x110] sm:$0xf]
  %v86 = vld [vmem:[%s1 + $0x114] sm:$0xf]
  %v87 = vld [vmem:[%s1 + $0x118] sm:$0xf]
  %v88 = vld [vmem:[%s1 + $0x11c] sm:$0xf]
  %v89 = vld [vmem:[%s1 + $0x120] sm:$0xf]
  %v90 = vld [vmem:[%s1 + $0x124] sm:$0xf]
  %v91 = vld [vmem:[%s1 + $0x128] sm:$0xf]
  %v92 = vld [vmem:[%s1 + $0x12c] sm:$0xf]
  %v93 = vld [vmem:[%s1 + $0x130] sm:$0xf]
  %v94 = vld [vmem:[%s1 + $0x134] sm:$0xf]
  %v95 = vld [vmem:[%s1 + $0x138] sm:$0xf]
  %v96 = vld [vmem:[%s1 + $0x13c] sm:$0xf]
  %v97 = vld [vmem:[%s1 + $0x140] sm:$0xf]
  %v98 = vld [vmem:[%s1 + $0x144] sm:$0xf]
  %v99 = vld [vmem:[%s1 + $0x148] sm:$0xf]
  %v100 = vld [vmem:[%s1 + $0x14c] sm:$0xf]
  %v101 = vld [vmem:[%s1 + $0x150] sm:$0xf]
  %v102 = vld [vmem:[%s1 + $0x154] sm:$0xf]
  %v103 = vld [vmem:[%s1 + $0x158] sm:$0xf]
  %v104 = vld [vmem:[%s1 + $0x15c] sm:$0xf]
  %v105 = vld [vmem:[%s1 + $0x160] sm:$0xf]
  %v106 = vld [vmem:[%s1 + $0x164] sm:$0xf]
  %v107 = vld [vmem:[%s1 + $0x168] sm:$0xf]
  %v108 = vld [vmem:[%s1 + $0x16c] sm:$0xf]
  %v109 = vld [vmem:[%s1 + $0x170] sm:$0xf]
  %v110 = vld [vmem:[%s1 + $0x174] sm:$0xf]
  %v111 = vld [vmem:[%s1 + $0x178] sm:$0xf]
  %v112 = vld [vmem:[%s1 + $0x17c] sm:$0xf]
  %v113 = vld [vmem:[%s2] sm:$0x1]
  %v115 = vperm.slane %v113, 0
  %v120 = vunpack.c.l.b16 %v14
  %v121 = vunpack.c.h.b16 %v14
  %v122 = vunpack.c.l.b16 %v15
  %v123 = vunpack.c.h.b16 %v15
  %v124 = vunpack.c.l.b16 %v16
  %v125 = vunpack.c.h.b16 %v16
  %v126 = vpack.c.b16 %v120, %v120
  %v127 = vpack.c.b16 %v121, %v121
  %v128 = vpack.c.b16 %v122, %v122
  %v129 = vpack.c.b16 %v123, %v123
  %v130 = vpack.c.b16 %v124, %v124
  %v131 = vpack.c.b16 %v125, %v125
  %v234 = vunpack.c.l.b16 %v17
  %v235 = vunpack.c.l.b16 %v18
  %v236 = vunpack.c.l.b16 %v19
  %v237 = vunpack.c.l.b16 %v20
  %v238 = vunpack.c.l.b16 %v21
  %v239 = vunpack.c.l.b16 %v22
  %v240 = vunpack.c.l.b16 %v23
  %v241 = vunpack.c.l.b16 %v24
  %v242 = vunpack.c.l.b16 %v25
  %v243 = vunpack.c.l.b16 %v26
  %v244 = vunpack.c.l.b16 %v27
  %v245 = vunpack.c.l.b16 %v28
  %v246 = vunpack.c.l.b16 %v29
  %v247 = vunpack.c.l.b16 %v30
  %v248 = vunpack.c.l.b16 %v31
  %v249 = vunpack.c.l.b16 %v32
  %v250 = vunpack.c.l.b16 %v33
  %v251 = vunpack.c.l.b16 %v34
  %v252 = vunpack.c.l.b16 %v35
  %v253 = vunpack.c.l.b16 %v36
  %v254 = vunpack.c.l.b16 %v37
  %v255 = vunpack.c.l.b16 %v38
  %v256 = vunpack.c.l.b16 %v39
  %v257 = vunpack.c.l.b16 %v40
  %v258 = vunpack.c.l.b16 %v41
  %v259 = vunpack.c.l.b16 %v42
  %v260 = vunpack.c.l.b16 %v43
  %v261 = vunpack.c.l.b16 %v44
  %v262 = vunpack.c.l.b16 %v45
  %v263 = vunpack.c.l.b16 %v46
  %v264 = vunpack.c.l.b16 %v47
  %v265 = vunpack.c.l.b16 %v48
  %v266 = vunpack.c.l.b16 %v49
  %v267 = vunpack.c.l.b16 %v50
  %v268 = vunpack.c.l.b16 %v51
  %v269 = vunpack.c.l.b16 %v52
  %v270 = vunpack.c.l.b16 %v53
  %v271 = vunpack.c.l.b16 %v54
  %v272 = vunpack.c.l.b16 %v55
  %v273 = vunpack.c.l.b16 %v56
  %v274 = vunpack.c.l.b16 %v57
  %v275 = vunpack.c.l.b16 %v58
  %v276 = vunpack.c.l.b16 %v59
  %v277 = vunpack.c.l.b16 %v60
  %v278 = vunpack.c.l.b16 %v61
  %v279 = vunpack.c.l.b16 %v62
  %v280 = vunpack.c.l.b16 %v63
  %v281 = vunpack.c.l.b16 %v64
  %v282 = vunpack.c.l.b16 %v65
  %v283 = vunpack.c.l.b16 %v66
  %v284 = vunpack.c.l.b16 %v67
  %v285 = vunpack.c.l.b16 %v68
  %v286 = vunpack.c.l.b16 %v69
  %v287 = vunpack.c.l.b16 %v70
  %v288 = vunpack.c.l.b16 %v71
  %v289 = vunpack.c.l.b16 %v72
  %v290 = vunpack.c.l.b16 %v73
  %v291 = vunpack.c.l.b16 %v74
  %v292 = vunpack.c.l.b16 %v75
  %v293 = vunpack.c.l.b16 %v76
  %v294 = vunpack.c.l.b16 %v77
  %v295 = vunpack.c.l.b16 %v78
  %v296 = vunpack.c.l.b16 %v79
  %v297 = vunpack.c.l.b16 %v80
  %v298 = vunpack.c.l.b16 %v81
  %v299 = vunpack.c.l.b16 %v82
  %v300 = vunpack.c.l.b16 %v83
  %v301 = vunpack.c.l.b16 %v84
  %v302 = vunpack.c.l.b16 %v85
  %v303 = vunpack.c.l.b16 %v86
  %v304 = vunpack.c.l.b16 %v87
  %v305 = vunpack.c.l.b16 %v88
  %v306 = vunpack.c.l.b16 %v89
  %v307 = vunpack.c.l.b16 %v90
  %v308 = vunpack.c.l.b16 %v91
  %v309 = vunpack.c.l.b16 %v92
  %v310 = vunpack.c.l.b16 %v93
  %v311 = vunpack.c.l.b16 %v94
  %v312 = vunpack.c.l.b16 %v95
  %v313 = vunpack.c.l.b16 %v96
  %v314 = vunpack.c.l.b16 %v97
  %v315 = vunpack.c.l.b16 %v98
  %v316 = vunpack.c.l.b16 %v99
  %v317 = vunpack.c.l.b16 %v100
  %v318 = vunpack.c.l.b16 %v101
  %v319 = vunpack.c.l.b16 %v102
  %v320 = vunpack.c.l.b16 %v103
  %v321 = vunpack.c.l.b16 %v104
  %v322 = vunpack.c.l.b16 %v105
  %v323 = vunpack.c.l.b16 %v106
  %v324 = vunpack.c.l.b16 %v107
  %v325 = vunpack.c.l.b16 %v108
  %v326 = vunpack.c.l.b16 %v109
  %v327 = vunpack.c.l.b16 %v110
  %v328 = vunpack.c.l.b16 %v111
  %v329 = vunpack.c.l.b16 %v112
  %v330 = vpack.c.b16 %v235, %v234
  %v331 = vpack.c.b16 %v237, %v236
  %v332 = vpack.c.b16 %v239, %v238
  %v333 = vpack.c.b16 %v241, %v240
  %v334 = vpack.c.b16 %v243, %v242
  %v335 = vpack.c.b16 %v245, %v244
  %v336 = vpack.c.b16 %v247, %v246
  %v337 = vpack.c.b16 %v249, %v248
  %v338 = vpack.c.b16 %v251, %v250
  %v339 = vpack.c.b16 %v253, %v252
  %v340 = vpack.c.b16 %v255, %v254
  %v341 = vpack.c.b16 %v257, %v256
  %v342 = vpack.c.b16 %v259, %v258
  %v343 = vpack.c.b16 %v261, %v260
  %v344 = vpack.c.b16 %v263, %v262
  %v345 = vpack.c.b16 %v265, %v264
  %v346 = vpack.c.b16 %v267, %v266
  %v347 = vpack.c.b16 %v269, %v268
  %v348 = vpack.c.b16 %v271, %v270
  %v349 = vpack.c.b16 %v273, %v272
  %v350 = vpack.c.b16 %v275, %v274
  %v351 = vpack.c.b16 %v277, %v276
  %v352 = vpack.c.b16 %v279, %v278
  %v353 = vpack.c.b16 %v281, %v280
  %v354 = vpack.c.b16 %v283, %v282
  %v355 = vpack.c.b16 %v285, %v284
  %v356 = vpack.c.b16 %v287, %v286
  %v357 = vpack.c.b16 %v289, %v288
  %v358 = vpack.c.b16 %v291, %v290
  %v359 = vpack.c.b16 %v293, %v292
  %v360 = vpack.c.b16 %v295, %v294
  %v361 = vpack.c.b16 %v297, %v296
  %v362 = vpack.c.b16 %v299, %v298
  %v363 = vpack.c.b16 %v301, %v300
  %v364 = vpack.c.b16 %v303, %v302
  %v365 = vpack.c.b16 %v305, %v304
  %v366 = vpack.c.b16 %v307, %v306
  %v367 = vpack.c.b16 %v309, %v308
  %v368 = vpack.c.b16 %v311, %v310
  %v369 = vpack.c.b16 %v313, %v312
  %v370 = vpack.c.b16 %v315, %v314
  %v371 = vpack.c.b16 %v317, %v316
  %v372 = vpack.c.b16 %v319, %v318
  %v373 = vpack.c.b16 %v321, %v320
  %v374 = vpack.c.b16 %v323, %v322
  %v375 = vpack.c.b16 %v325, %v324
  %v376 = vpack.c.b16 %v327, %v326
  %v377 = vpack.c.b16 %v329, %v328
  %426 = vmatpush.bf16.msra.mxu0 %v337
  %427 = vmatpush.bf16.msra.mxu0 %v336
  %428 = vmatpush.bf16.msra.mxu0 %v335
  %429 = vmatpush.bf16.msra.mxu0 %v334
  %430 = vmatpush.bf16.msra.mxu0 %v333
  %431 = vmatpush.bf16.msra.mxu0 %v332
  %432 = vmatpush.bf16.msra.mxu0 %v331
  %433 = vmatpush.bf16.msra.mxu0 %v330
  %434 = vmatmul.bf16.gmra.mxu0 %v126
  %v435 = vpop.f32.mrf.mxu0
  %v436 = vadd.f32 %v115, %v435
  %v437 = vpop.f32.mrf.mxu0
  %438 = vdwg.mxu0
  %439 = vmatpush.bf16.msra.mxu0 %v345
  %440 = vmatpush.bf16.msra.mxu0 %v344
  %441 = vmatpush.bf16.msra.mxu0 %v343
  %442 = vmatpush.bf16.msra.mxu0 %v342
  %443 = vmatpush.bf16.msra.mxu0 %v341
  %444 = vmatpush.bf16.msra.mxu0 %v340
  %445 = vmatpush.bf16.msra.mxu0 %v339
  %446 = vmatpush.bf16.msra.mxu0 %v338
  %447 = vmatmul.bf16.gmra.mxu0 %v127
  %v448 = vpop.f32.mrf.mxu0
  %v449 = vadd.f32 %v436, %v448
  %v450 = vpop.f32.mrf.mxu0
  %451 = vdwg.mxu0
  %452 = vmatpush.bf16.msra.mxu0 %v353
  %453 = vmatpush.bf16.msra.mxu0 %v352
  %454 = vmatpush.bf16.msra.mxu0 %v351
  %455 = vmatpush.bf16.msra.mxu0 %v350
  %456 = vmatpush.bf16.msra.mxu0 %v349
  %457 = vmatpush.bf16.msra.mxu0 %v348
  %458 = vmatpush.bf16.msra.mxu0 %v347
  %459 = vmatpush.bf16.msra.mxu0 %v346
  %460 = vmatmul.bf16.gmra.mxu0 %v128
  %v461 = vpop.f32.mrf.mxu0
  %v462 = vadd.f32 %v449, %v461
  %v463 = vpop.f32.mrf.mxu0
  %464 = vdwg.mxu0
  %465 = vmatpush.bf16.msra.mxu0 %v361
  %466 = vmatpush.bf16.msra.mxu0 %v360
  %467 = vmatpush.bf16.msra.mxu0 %v359
  %468 = vmatpush.bf16.msra.mxu0 %v358
  %469 = vmatpush.bf16.msra.mxu0 %v357
  %470 = vmatpush.bf16.msra.mxu0 %v356
  %471 = vmatpush.bf16.msra.mxu0 %v355
  %472 = vmatpush.bf16.msra.mxu0 %v354
  %473 = vmatmul.bf16.gmra.mxu0 %v129
  %v474 = vpop.f32.mrf.mxu0
  %v475 = vadd.f32 %v462, %v474
  %v476 = vpop.f32.mrf.mxu0
  %477 = vdwg.mxu0
  %478 = vmatpush.bf16.msra.mxu0 %v369
  %479 = vmatpush.bf16.msra.mxu0 %v368
  %480 = vmatpush.bf16.msra.mxu0 %v367
  %481 = vmatpush.bf16.msra.mxu0 %v366
  %482 = vmatpush.bf16.msra.mxu0 %v365
  %483 = vmatpush.bf16.msra.mxu0 %v364
  %484 = vmatpush.bf16.msra.mxu0 %v363
  %485 = vmatpush.bf16.msra.mxu0 %v362
  %486 = vmatmul.bf16.gmra.mxu0 %v130
  %v487 = vpop.f32.mrf.mxu0
  %v488 = vadd.f32 %v475, %v487
  %v489 = vpop.f32.mrf.mxu0
  %490 = vdwg.mxu0
  %491 = vmatpush.bf16.msra.mxu0 %v377
  %492 = vmatpush.bf16.msra.mxu0 %v376
  %493 = vmatpush.bf16.msra.mxu0 %v375
  %494 = vmatpush.bf16.msra.mxu0 %v374
  %495 = vmatpush.bf16.msra.mxu0 %v373
  %496 = vmatpush.bf16.msra.mxu0 %v372
  %497 = vmatpush.bf16.msra.mxu0 %v371
  %498 = vmatpush.bf16.msra.mxu0 %v370
  %499 = vmatmul.bf16.gmra.mxu0 %v131
  %v500 = vpop.f32.mrf.mxu0
  %v501 = vadd.f32 %v488, %v500
  %v502 = vpop.f32.mrf.mxu0
  %503 = vdwg.mxu0
  %v504 = vpack.c.bf16 %v501, %v501
  %vm505 = vcmask 519168
  %506 = vst.msk [vmem:[%s3] sm:$0xf] %vm505, %v504
  // Predicated region
  $region14: #{vit_forward.12} parent=0 // pred_check
    _
  $region15: #{vit_forward.12} parent=0 // pred_check_branch
    %508 = sbr.rel (0) target = $region17
  $region16: #{vit_forward.12} parent=0 // pred_region
    _
  $region17: #{vit_forward.12} parent=0 // pred_fallthru
    _
  // Predicated region
  $region18: #{vit_forward.12} parent=0 // pred_check
    _
  $region19: #{vit_forward.12} parent=0 // pred_check_branch
    %510 = sbr.rel (0) target = $region21
  $region20: #{vit_forward.12} parent=0 // pred_region
    _
  $region21: #{vit_forward.12} parent=0 // pred_fallthru
    _

// kernel: vit_forward.16
$region0: #{vit_forward.16}
  #allocation0 [shape = 'u32[]', space=smem, size = 0x4, offset = 0x4, fixed_abs, tag = 'smem constant byte address 0x4 - core index']
  #allocation1 [shape = 'u32[72,128]{1,0:T(1,128)}', space=vmem, size = 0x9000, scoped, tag = 'internal scratch']
  %s0 = inlined_call_operand.vmem [shape: f32[10,64], index: 0, kind: input, shape index: {}]
  %s1 = inlined_call_operand.vmem [shape: f32[1,64], index: 1, kind: input, shape index: {}]
  %s2 = inlined_call_operand.vmem [shape: f32[1,64], index: 2, kind: input, shape index: {}]
  %s3 = inlined_call_operand.vmem [shape: bf16[64,256], index: 3, kind: input, shape index: {}]
  %s4 = inlined_call_operand.vmem [shape: f32[1,256], index: 4, kind: input, shape index: {}]
  %s5 = inlined_call_operand.vmem [shape: bf16[10,256], index: 5, kind: output, shape index: {}]
  %s6 = sld [smem:[#allocation0]]
  $region30: #{vit_forward.16} parent=0
    _
  %s8 = ssub.s32 1, %s6
  %s9 = scalar_select 0, %s8, %s6
  // Predicated region
  $region2: #{vit_forward.16} parent=0 // pred_check
    _
  $region3: #{vit_forward.16} parent=0 // pred_check_branch
    %11 = sbr.rel (0) target = $region5
  $region4: #{vit_forward.16} parent=0 // pred_region
    _
  $region5: #{vit_forward.16} parent=0 // pred_fallthru
    _
  // Predicated region
  $region6: #{vit_forward.16} parent=0 // pred_check
    _
  $region7: #{vit_forward.16} parent=0 // pred_check_branch
    %13 = sbr.rel (0) target = $region9
  $region8: #{vit_forward.16} parent=0 // pred_region
    _
  $region9: #{vit_forward.16} parent=0 // pred_fallthru
    _
  // Predicated region
  $region10: #{vit_forward.16} parent=0 // pred_check
    _
  $region11: #{vit_forward.16} parent=0 // pred_check_branch
    %15 = sbr.rel (0) target = $region13
  $region12: #{vit_forward.16} parent=0 // pred_region
    _
  $region13: #{vit_forward.16} parent=0 // pred_fallthru
    _
  // Predicated region
  $region14: #{vit_forward.16} parent=0 // pred_check
    _
  $region15: #{vit_forward.16} parent=0 // pred_check_branch
    %17 = sbr.rel (0) target = $region17
  $region16: #{vit_forward.16} parent=0 // pred_region
    _
  $region17: #{vit_forward.16} parent=0 // pred_fallthru
    _
  // Predicated region
  $region18: #{vit_forward.16} parent=0 // pred_check
    _
  $region19: #{vit_forward.16} parent=0 // pred_check_branch
    %19 = sbr.rel (0) target = $region21
  $region20: #{vit_forward.16} parent=0 // pred_region
    _
  $region21: #{vit_forward.16} parent=0 // pred_fallthru
    _
  %v21 = vld [vmem:[%s0] sm:$0xff]
  %v22 = vld [vmem:[%s0 + $0x8] sm:$0x3]
  %vm23 = vcmask 523264
  %v24 = vsel %vm23, %v21, 0.0
  %25 = vadd.xlane.f32.xlu0 %v24
  %v26 = vpop.xlane.xlu0 %25
  %vm27 = vcmask 517120
  %v28 = vsel %vm27, %v22, 0.0
  %29 = vadd.xlane.f32.xlu0 %v28
  %v30 = vpop.xlane.xlu0 %29
  %v31 = vrcp.pop 64.0
  %v32 = vmul.f32 64.0, %v31
  %v33 = vsub.f32 1.0, %v32
  %v34 = vmul.f32 %v31, %v33
  %v35 = vadd.f32 %v31, %v34
  %vm36 = vweird.f32 %v31
  %v37 = vsel %vm36, %v31, %v35
  %v38 = vmul.f32 %v26, %v37
  %v39 = vmul.f32 %v30, %v37
  %v40 = vsub.f32 %v21, %v38
  %v41 = vsub.f32 %v22, %v39
  %v42 = vmul.f32 %v40, %v40
  %v43 = vmul.f32 %v41, %v41
  %v44 = vsel %vm23, %v42, 0.0
  %45 = vadd.xlane.f32.xlu0 %v44
  %v46 = vpop.xlane.xlu0 %45
  %v47 = vsel %vm27, %v43, 0.0
  %48 = vadd.xlane.f32.xlu0 %v47
  %v49 = vpop.xlane.xlu0 %48
  %v50 = vmul.f32 %v46, %v37
  %v51 = vmul.f32 %v49, %v37
  %v52 = vadd.f32 %v50, 1e-06
  %v53 = vadd.f32 %v51, 1e-06
  %v54 = vrsqrt.pop %v52
  %v55 = vmul.f32 %v54, %v52
  %v56 = vmul.f32 %v55, %v54
  %v57 = vmul.f32 0.5, %v56
  %v58 = vsub.f32 1.5, %v57
  %v59 = vmul.f32 %v54, %v58
  %vm60 = vweird.f32 %v52
  %vm61 = vweird.f32 %v54
  %vm62 = vmor %vm60, %vm61
  %v63 = vsel %vm62, %v54, %v59
  %v64 = vrsqrt.pop %v53
  %v65 = vmul.f32 %v64, %v53
  %v66 = vmul.f32 %v65, %v64
  %v67 = vmul.f32 0.5, %v66
  %v68 = vsub.f32 1.5, %v67
  %v69 = vmul.f32 %v64, %v68
  %vm70 = vweird.f32 %v53
  %vm71 = vweird.f32 %v64
  %vm72 = vmor %vm70, %vm71
  %v73 = vsel %vm72, %v64, %v69
  %v74 = vmul.f32 %v40, %v63
  %v75 = vmul.f32 %v41, %v73
  %v76 = vld [vmem:[%s1] sm:$0x1]
  %v78 = vperm.slane %v76, 0
  %v80 = vmul.f32 %v74, %v78
  %v81 = vmul.f32 %v75, %v78
  %v82 = vld [vmem:[%s2] sm:$0x1]
  %v84 = vperm.slane %v82, 0
  %v86 = vadd.f32 %v80, %v84
  %v87 = vadd.f32 %v81, %v84
  %v88 = vpack.c.bf16 %v87, %v86
  %v89 = vld [vmem:[%s3] sm:$0xff]
  %v90 = vld [vmem:[%s3 + $0x8] sm:$0xff]
  %v91 = vld [vmem:[%s3 + $0x10] sm:$0xff]
  %v92 = vld [vmem:[%s3 + $0x18] sm:$0xff]
  %v93 = vld [vmem:[%s3 + $0x20] sm:$0xff]
  %v94 = vld [vmem:[%s3 + $0x28] sm:$0xff]
  %v95 = vld [vmem:[%s3 + $0x30] sm:$0xff]
  %v96 = vld [vmem:[%s3 + $0x38] sm:$0xff]
  %v97 = vld [vmem:[%s4] sm:$0x3]
  %v99 = vperm.slane %v97, 0
  %v100 = vperm.slane %v97, 1
  %v111 = vunpack.c.l.b16 %v89
  %v112 = vunpack.c.h.b16 %v89
  %v113 = vunpack.c.l.b16 %v90
  %v114 = vunpack.c.h.b16 %v90
  %v115 = vunpack.c.l.b16 %v91
  %v116 = vunpack.c.h.b16 %v91
  %v117 = vunpack.c.l.b16 %v92
  %v118 = vunpack.c.h.b16 %v92
  %v119 = vunpack.c.l.b16 %v93
  %v120 = vunpack.c.h.b16 %v93
  %v121 = vunpack.c.l.b16 %v94
  %v122 = vunpack.c.h.b16 %v94
  %v123 = vunpack.c.l.b16 %v95
  %v124 = vunpack.c.h.b16 %v95
  %v125 = vunpack.c.l.b16 %v96
  %v126 = vunpack.c.h.b16 %v96
  %v127 = vpack.c.b16 %v113, %v111
  %v128 = vpack.c.b16 %v114, %v112
  %v129 = vpack.c.b16 %v117, %v115
  %v130 = vpack.c.b16 %v118, %v116
  %v131 = vpack.c.b16 %v121, %v119
  %v132 = vpack.c.b16 %v122, %v120
  %v133 = vpack.c.b16 %v125, %v123
  %v134 = vpack.c.b16 %v126, %v124
  %v144 = vsel %vm23, %v88, 0
  %146 = vmatpush.bf16.msra.mxu0 0
  %147 = vmatpush.bf16.msra.mxu0 0
  %148 = vmatpush.bf16.msra.mxu0 0
  %149 = vmatpush.bf16.msra.mxu0 0
  %150 = vmatpush.bf16.msra.mxu0 %v133
  %151 = vmatpush.bf16.msra.mxu0 %v131
  %152 = vmatpush.bf16.msra.mxu0 %v129
  %153 = vmatpush.bf16.msra.mxu0 %v127
  %154 = vmatmul.bf16.gmra.mxu0 %v144
  %v155 = vpop.f32.mrf.mxu0
  %v156 = vadd.f32 %v99, %v155
  %v157 = vpop.f32.mrf.mxu0
  %v158 = vadd.f32 %v99, %v157
  %159 = vdwg.mxu0
  %160 = vmatpush.bf16.msra.mxu0 0
  %161 = vmatpush.bf16.msra.mxu0 0
  %162 = vmatpush.bf16.msra.mxu0 0
  %163 = vmatpush.bf16.msra.mxu0 0
  %164 = vmatpush.bf16.msra.mxu0 %v134
  %165 = vmatpush.bf16.msra.mxu0 %v132
  %166 = vmatpush.bf16.msra.mxu0 %v130
  %167 = vmatpush.bf16.msra.mxu0 %v128
  %168 = vmatmul.bf16.gmra.mxu0 %v144
  %v169 = vpop.f32.mrf.mxu0
  %v170 = vadd.f32 %v100, %v169
  %v171 = vpop.f32.mrf.mxu0
  %v172 = vadd.f32 %v100, %v171
  %173 = vdwg.mxu0
  %v174 = vmul.f32 %v156, 0.5
  %v175 = vmul.f32 %v170, 0.5
  %v176 = vmul.f32 %v158, 0.5
  %v177 = vmul.f32 %v172, 0.5
  %v178 = vmul.f32 %v156, 0.044715
  %v179 = vmul.f32 %v170, 0.044715
  %v180 = vmul.f32 %v158, 0.044715
  %v181 = vmul.f32 %v172, 0.044715
  %v182 = vmul.f32 %v178, %v156
  %v183 = vmul.f32 %v179, %v170
  %v184 = vmul.f32 %v180, %v158
  %v185 = vmul.f32 %v181, %v172
  %v186 = vmul.f32 %v182, %v156
  %v187 = vmul.f32 %v183, %v170
  %v188 = vmul.f32 %v184, %v158
  %v189 = vmul.f32 %v185, %v172
  %v190 = vadd.f32 %v156, %v186
  %v191 = vadd.f32 %v170, %v187
  %v192 = vadd.f32 %v158, %v188
  %v193 = vadd.f32 %v172, %v189
  %v194 = vmul.f32 %v190, 0.7978846
  %v195 = vmul.f32 %v191, 0.7978846
  %v196 = vmul.f32 %v192, 0.7978846
  %v197 = vmul.f32 %v193, 0.7978846
  %v198 = vtanh.pop %v194
  %v199 = vtanh.pop %v195
  %v200 = vtanh.pop %v196
  %v201 = vtanh.pop %v197
  %v202 = vadd.f32 %v198, 1.0
  %v203 = vadd.f32 %v199, 1.0
  %v204 = vadd.f32 %v200, 1.0
  %v205 = vadd.f32 %v201, 1.0
  %v206 = vmul.f32 %v174, %v202
  %v207 = vmul.f32 %v175, %v203
  %v208 = vmul.f32 %v176, %v204
  %v209 = vmul.f32 %v177, %v205
  %v210 = vpack.c.bf16 %v207, %v206
  %v211 = vpack.c.bf16 %v209, %v208
  %212 = vst [vmem:[%s5] sm:$0xff] %v210
  %213 = vst [vmem:[%s5 + $0x8] sm:$0x11] %v211
  // Predicated region
  $region22: #{vit_forward.16} parent=0 // pred_check
    _
  $region23: #{vit_forward.16} parent=0 // pred_check_branch
    %215 = sbr.rel (0) target = $region25
  $region24: #{vit_forward.16} parent=0 // pred_region
    _
  $region25: #{vit_forward.16} parent=0 // pred_fallthru
    _
  // Predicated region
  $region26: #{vit_forward.16} parent=0 // pred_check
    _
  $region27: #{vit_forward.16} parent=0 // pred_check_branch
    %217 = sbr.rel (0) target = $region29
  $region28: #{vit_forward.16} parent=0 // pred_region
    _
  $region29: #{vit_forward.16} parent=0 // pred_fallthru
    _

// kernel: vit_forward.17
$region0: #{vit_forward.17}
  #allocation0 [shape = 'u32[]', space=smem, size = 0x4, offset = 0x4, fixed_abs, tag = 'smem constant byte address 0x4 - core index']
  #allocation1 [shape = 'u32[72,128]{1,0:T(1,128)}', space=vmem, size = 0x9000, scoped, tag = 'internal scratch']
  %s0 = inlined_call_operand.vmem [shape: bf16[10,256], index: 0, kind: input, shape index: {}]
  %s1 = inlined_call_operand.vmem [shape: bf16[256,64], index: 1, kind: input, shape index: {}]
  %s2 = inlined_call_operand.vmem [shape: f32[1,64], index: 2, kind: input, shape index: {}]
  %s3 = inlined_call_operand.vmem [shape: f32[10,64], index: 3, kind: input, shape index: {}]
  %s4 = inlined_call_operand.vmem [shape: f32[10,64], index: 4, kind: output, shape index: {}]
  %s5 = sld [smem:[#allocation0]]
  $region26: #{vit_forward.17} parent=0
    _
  %s7 = ssub.s32 1, %s5
  %s8 = scalar_select 0, %s7, %s5
  // Predicated region
  $region2: #{vit_forward.17} parent=0 // pred_check
    _
  $region3: #{vit_forward.17} parent=0 // pred_check_branch
    %10 = sbr.rel (0) target = $region5
  $region4: #{vit_forward.17} parent=0 // pred_region
    _
  $region5: #{vit_forward.17} parent=0 // pred_fallthru
    _
  // Predicated region
  $region6: #{vit_forward.17} parent=0 // pred_check
    _
  $region7: #{vit_forward.17} parent=0 // pred_check_branch
    %12 = sbr.rel (0) target = $region9
  $region8: #{vit_forward.17} parent=0 // pred_region
    _
  $region9: #{vit_forward.17} parent=0 // pred_fallthru
    _
  // Predicated region
  $region10: #{vit_forward.17} parent=0 // pred_check
    _
  $region11: #{vit_forward.17} parent=0 // pred_check_branch
    %14 = sbr.rel (0) target = $region13
  $region12: #{vit_forward.17} parent=0 // pred_region
    _
  $region13: #{vit_forward.17} parent=0 // pred_fallthru
    _
  // Predicated region
  $region14: #{vit_forward.17} parent=0 // pred_check
    _
  $region15: #{vit_forward.17} parent=0 // pred_check_branch
    %16 = sbr.rel (0) target = $region17
  $region16: #{vit_forward.17} parent=0 // pred_region
    _
  $region17: #{vit_forward.17} parent=0 // pred_fallthru
    _
  %v17 = vld [vmem:[%s0] sm:$0xff]
  %v18 = vld [vmem:[%s0 + $0x8] sm:$0x11]
  %v19 = vld [vmem:[%s1] sm:$0xf]
  %v20 = vld [vmem:[%s1 + $0x4] sm:$0xf]
  %v21 = vld [vmem:[%s1 + $0x8] sm:$0xf]
  %v22 = vld [vmem:[%s1 + $0xc] sm:$0xf]
  %v23 = vld [vmem:[%s1 + $0x10] sm:$0xf]
  %v24 = vld [vmem:[%s1 + $0x14] sm:$0xf]
  %v25 = vld [vmem:[%s1 + $0x18] sm:$0xf]
  %v26 = vld [vmem:[%s1 + $0x1c] sm:$0xf]
  %v27 = vld [vmem:[%s1 + $0x20] sm:$0xf]
  %v28 = vld [vmem:[%s1 + $0x24] sm:$0xf]
  %v29 = vld [vmem:[%s1 + $0x28] sm:$0xf]
  %v30 = vld [vmem:[%s1 + $0x2c] sm:$0xf]
  %v31 = vld [vmem:[%s1 + $0x30] sm:$0xf]
  %v32 = vld [vmem:[%s1 + $0x34] sm:$0xf]
  %v33 = vld [vmem:[%s1 + $0x38] sm:$0xf]
  %v34 = vld [vmem:[%s1 + $0x3c] sm:$0xf]
  %v35 = vld [vmem:[%s1 + $0x40] sm:$0xf]
  %v36 = vld [vmem:[%s1 + $0x44] sm:$0xf]
  %v37 = vld [vmem:[%s1 + $0x48] sm:$0xf]
  %v38 = vld [vmem:[%s1 + $0x4c] sm:$0xf]
  %v39 = vld [vmem:[%s1 + $0x50] sm:$0xf]
  %v40 = vld [vmem:[%s1 + $0x54] sm:$0xf]
  %v41 = vld [vmem:[%s1 + $0x58] sm:$0xf]
  %v42 = vld [vmem:[%s1 + $0x5c] sm:$0xf]
  %v43 = vld [vmem:[%s1 + $0x60] sm:$0xf]
  %v44 = vld [vmem:[%s1 + $0x64] sm:$0xf]
  %v45 = vld [vmem:[%s1 + $0x68] sm:$0xf]
  %v46 = vld [vmem:[%s1 + $0x6c] sm:$0xf]
  %v47 = vld [vmem:[%s1 + $0x70] sm:$0xf]
  %v48 = vld [vmem:[%s1 + $0x74] sm:$0xf]
  %v49 = vld [vmem:[%s1 + $0x78] sm:$0xf]
  %v50 = vld [vmem:[%s1 + $0x7c] sm:$0xf]
  %v51 = vld [vmem:[%s2] sm:$0x1]
  %v53 = vperm.slane %v51, 0
  %v57 = vunpack.c.l.b16 %v17
  %v58 = vunpack.c.h.b16 %v17
  %v59 = vunpack.c.l.b16 %v18
  %v60 = vunpack.c.h.b16 %v18
  %v61 = vpack.c.b16 %v59, %v57
  %v62 = vpack.c.b16 %v60, %v58
  %v97 = vunpack.c.l.b16 %v19
  %v98 = vunpack.c.l.b16 %v20
  %v99 = vunpack.c.l.b16 %v21
  %v100 = vunpack.c.l.b16 %v22
  %v101 = vunpack.c.l.b16 %v23
  %v102 = vunpack.c.l.b16 %v24
  %v103 = vunpack.c.l.b16 %v25
  %v104 = vunpack.c.l.b16 %v26
  %v105 = vunpack.c.l.b16 %v27
  %v106 = vunpack.c.l.b16 %v28
  %v107 = vunpack.c.l.b16 %v29
  %v108 = vunpack.c.l.b16 %v30
  %v109 = vunpack.c.l.b16 %v31
  %v110 = vunpack.c.l.b16 %v32
  %v111 = vunpack.c.l.b16 %v33
  %v112 = vunpack.c.l.b16 %v34
  %v113 = vunpack.c.l.b16 %v35
  %v114 = vunpack.c.l.b16 %v36
  %v115 = vunpack.c.l.b16 %v37
  %v116 = vunpack.c.l.b16 %v38
  %v117 = vunpack.c.l.b16 %v39
  %v118 = vunpack.c.l.b16 %v40
  %v119 = vunpack.c.l.b16 %v41
  %v120 = vunpack.c.l.b16 %v42
  %v121 = vunpack.c.l.b16 %v43
  %v122 = vunpack.c.l.b16 %v44
  %v123 = vunpack.c.l.b16 %v45
  %v124 = vunpack.c.l.b16 %v46
  %v125 = vunpack.c.l.b16 %v47
  %v126 = vunpack.c.l.b16 %v48
  %v127 = vunpack.c.l.b16 %v49
  %v128 = vunpack.c.l.b16 %v50
  %v129 = vpack.c.b16 %v98, %v97
  %v130 = vpack.c.b16 %v100, %v99
  %v131 = vpack.c.b16 %v102, %v101
  %v132 = vpack.c.b16 %v104, %v103
  %v133 = vpack.c.b16 %v106, %v105
  %v134 = vpack.c.b16 %v108, %v107
  %v135 = vpack.c.b16 %v110, %v109
  %v136 = vpack.c.b16 %v112, %v111
  %v137 = vpack.c.b16 %v114, %v113
  %v138 = vpack.c.b16 %v116, %v115
  %v139 = vpack.c.b16 %v118, %v117
  %v140 = vpack.c.b16 %v120, %v119
  %v141 = vpack.c.b16 %v122, %v121
  %v142 = vpack.c.b16 %v124, %v123
  %v143 = vpack.c.b16 %v126, %v125
  %v144 = vpack.c.b16 %v128, %v127
  %161 = vmatpush.bf16.msra.mxu0 %v136
  %162 = vmatpush.bf16.msra.mxu0 %v135
  %163 = vmatpush.bf16.msra.mxu0 %v134
  %164 = vmatpush.bf16.msra.mxu0 %v133
  %165 = vmatpush.bf16.msra.mxu0 %v132
  %166 = vmatpush.bf16.msra.mxu0 %v131
  %167 = vmatpush.bf16.msra.mxu0 %v130
  %168 = vmatpush.bf16.msra.mxu0 %v129
  %169 = vmatmul.bf16.gmra.mxu0 %v61
  %v170 = vpop.f32.mrf.mxu0
  %v171 = vadd.f32 %v53, %v170
  %v172 = vpop.f32.mrf.mxu0
  %v173 = vadd.f32 %v53, %v172
  %174 = vdwg.mxu0
  %175 = vmatpush.bf16.msra.mxu0 %v144
  %176 = vmatpush.bf16.msra.mxu0 %v143
  %177 = vmatpush.bf16.msra.mxu0 %v142
  %178 = vmatpush.bf16.msra.mxu0 %v141
  %179 = vmatpush.bf16.msra.mxu0 %v140
  %180 = vmatpush.bf16.msra.mxu0 %v139
  %181 = vmatpush.bf16.msra.mxu0 %v138
  %182 = vmatpush.bf16.msra.mxu0 %v137
  %183 = vmatmul.bf16.gmra.mxu0 %v62
  %v184 = vpop.f32.mrf.mxu0
  %v185 = vadd.f32 %v171, %v184
  %v186 = vpop.f32.mrf.mxu0
  %v187 = vadd.f32 %v173, %v186
  %188 = vdwg.mxu0
  %v189 = vld [vmem:[%s3] sm:$0xff]
  %v190 = vld [vmem:[%s3 + $0x8] sm:$0x3]
  %v191 = vadd.f32 %v185, %v189
  %v192 = vadd.f32 %v187, %v190
  %vm193 = vcmask 523264
  %194 = vst.msk [vmem:[%s4] sm:$0xff] %vm193, %v191
  %vm195 = vcmask 517120
  %196 = vst.msk [vmem:[%s4 + $0x8] sm:$0x3] %vm195, %v192
  // Predicated region
  $region18: #{vit_forward.17} parent=0 // pred_check
    _
  $region19: #{vit_forward.17} parent=0 // pred_check_branch
    %198 = sbr.rel (0) target = $region21
  $region20: #{vit_forward.17} parent=0 // pred_region
    _
  $region21: #{vit_forward.17} parent=0 // pred_fallthru
    _
  // Predicated region
  $region22: #{vit_forward.17} parent=0 // pred_check
    _
  $region23: #{vit_forward.17} parent=0 // pred_check_branch
    %200 = sbr.rel (0) target = $region25
  $region24: #{vit_forward.17} parent=0 // pred_region
    _
  $region25: #{vit_forward.17} parent=0 // pred_fallthru
    _

// kernel: vit_forward.23
$region0: #{vit_forward.23}
  #allocation0 [shape = 'u32[]', space=smem, size = 0x4, offset = 0x4, fixed_abs, tag = 'smem constant byte address 0x4 - core index']
  #allocation1 [shape = 'u32[72,128]{1,0:T(1,128)}', space=vmem, size = 0x9000, scoped, tag = 'internal scratch']
  %s0 = inlined_call_operand.vmem [shape: f32[2,64], index: 0, kind: input, shape index: {}]
  %s1 = inlined_call_operand.vmem [shape: f32[1,64], index: 1, kind: input, shape index: {}]
  %s2 = inlined_call_operand.vmem [shape: f32[1,64], index: 2, kind: input, shape index: {}]
  %s3 = inlined_call_operand.vmem [shape: f32[2,64], index: 3, kind: output, shape index: {}]
  %s4 = sld [smem:[#allocation0]]
  $region22: #{vit_forward.23} parent=0
    _
  %s6 = ssub.s32 1, %s4
  %s7 = scalar_select 0, %s6, %s4
  // Predicated region
  $region2: #{vit_forward.23} parent=0 // pred_check
    _
  $region3: #{vit_forward.23} parent=0 // pred_check_branch
    %9 = sbr.rel (0) target = $region5
  $region4: #{vit_forward.23} parent=0 // pred_region
    _
  $region5: #{vit_forward.23} parent=0 // pred_fallthru
    _
  // Predicated region
  $region6: #{vit_forward.23} parent=0 // pred_check
    _
  $region7: #{vit_forward.23} parent=0 // pred_check_branch
    %11 = sbr.rel (0) target = $region9
  $region8: #{vit_forward.23} parent=0 // pred_region
    _
  $region9: #{vit_forward.23} parent=0 // pred_fallthru
    _
  // Predicated region
  $region10: #{vit_forward.23} parent=0 // pred_check
    _
  $region11: #{vit_forward.23} parent=0 // pred_check_branch
    %13 = sbr.rel (0) target = $region13
  $region12: #{vit_forward.23} parent=0 // pred_region
    _
  $region13: #{vit_forward.23} parent=0 // pred_fallthru
    _
  %v14 = vld [vmem:[%s0] sm:$0x3]
  %vm15 = vcmask 517120
  %v16 = vsel %vm15, %v14, 0.0
  %17 = vadd.xlane.f32.xlu0 %v16
  %v18 = vpop.xlane.xlu0 %17
  %v19 = vrcp.pop 64.0
  %v20 = vmul.f32 64.0, %v19
  %v21 = vsub.f32 1.0, %v20
  %v22 = vmul.f32 %v19, %v21
  %v23 = vadd.f32 %v19, %v22
  %vm24 = vweird.f32 %v19
  %v25 = vsel %vm24, %v19, %v23
  %v26 = vmul.f32 %v18, %v25
  %v27 = vsub.f32 %v14, %v26
  %v28 = vmul.f32 %v27, %v27
  %v29 = vsel %vm15, %v28, 0.0
  %30 = vadd.xlane.f32.xlu0 %v29
  %v31 = vpop.xlane.xlu0 %30
  %v32 = vmul.f32 %v31, %v25
  %v33 = vadd.f32 %v32, 1e-06
  %v34 = vrsqrt.pop %v33
  %v35 = vmul.f32 %v34, %v33
  %v36 = vmul.f32 %v35, %v34
  %v37 = vmul.f32 0.5, %v36
  %v38 = vsub.f32 1.5, %v37
  %v39 = vmul.f32 %v34, %v38
  %vm40 = vweird.f32 %v33
  %vm41 = vweird.f32 %v34
  %vm42 = vmor %vm40, %vm41
  %v43 = vsel %vm42, %v34, %v39
  %v44 = vmul.f32 %v27, %v43
  %v45 = vld [vmem:[%s1] sm:$0x1]
  %v47 = vperm.slane %v45, 0
  %v49 = vmul.f32 %v44, %v47
  %v50 = vld [vmem:[%s2] sm:$0x1]
  %v52 = vperm.slane %v50, 0
  %v54 = vadd.f32 %v49, %v52
  %55 = vst.msk [vmem:[%s3] sm:$0x3] %vm15, %v54
  // Predicated region
  $region14: #{vit_forward.23} parent=0 // pred_check
    _
  $region15: #{vit_forward.23} parent=0 // pred_check_branch
    %57 = sbr.rel (0) target = $region17
  $region16: #{vit_forward.23} parent=0 // pred_region
    _
  $region17: #{vit_forward.23} parent=0 // pred_fallthru
    _
  // Predicated region
  $region18: #{vit_forward.23} parent=0 // pred_check
    _
  $region19: #{vit_forward.23} parent=0 // pred_check_branch
    %59 = sbr.rel (0) target = $region21
  $region20: #{vit_forward.23} parent=0 // pred_region
    _
  $region21: #{vit_forward.23} parent=0 // pred_fallthru
    _

</llo_original>
